<compile_context>
chip_gen: v5e
topology: v5e:2x2
jax: 0.10.0
libtpu: 0.0.40
codegen_flags: <defaults>
</compile_context>

<pallas_src>
import functools

import jax
import jax.numpy as jnp
from jax.experimental import pallas as pl
from jax.experimental.pallas import tpu as pltpu


HIDDEN = 512


def _round_up(n, m):
    return ((n + m - 1) // m) * m


def actor_kernel(x_ref,
                 w1_ref, b1_ref,
                 w2_ref, b2_ref,
                 w3_ref, b3_ref,
                 wh_ref, bh_ref,
                 out_ref):
    """One batch tile of the Actor forward; weights live in VMEM across tiles."""
    # layer_1 + ReLU: bf16 x bf16 MXU matmul, f32 accumulation, f32 elementwise.
    x = x_ref[...].astype(jnp.bfloat16)
    h = jnp.dot(x, w1_ref[...], preferred_element_type=jnp.float32) + b1_ref[...]
    h = jnp.maximum(h, 0.0)

    # layer_2 + ReLU
    h = jnp.dot(h.astype(jnp.bfloat16), w2_ref[...],
                preferred_element_type=jnp.float32) + b2_ref[...]
    h = jnp.maximum(h, 0.0)

    # layer_3 + ReLU
    h = jnp.dot(h.astype(jnp.bfloat16), w3_ref[...],
                preferred_element_type=jnp.float32) + b3_ref[...]
    h = jnp.maximum(h, 0.0)

    # Fused heads: one (512, 2) matmul, sigmoid on column 0, tanh on column 1.
    o = jnp.dot(h.astype(jnp.bfloat16), wh_ref[...],
                preferred_element_type=jnp.float32) + bh_ref[...]
    col = jax.lax.broadcasted_iota(jnp.int32, o.shape, 1)
    out_ref[...] = jnp.where(col == 0, jax.nn.sigmoid(o), jnp.tanh(o))


@functools.partial(jax.jit, static_argnames=("tile_b",))
def actor_forward(x, prepared_params, *, tile_b=512):
    """x: (B, dim_state) float32 -> (lin_vel (B,1), ang_vel (B,1))."""
    B, dim_state = x.shape
    w1, b1, w2, b2, w3, b3, wh, bh = prepared_params

    # Batch tile: multiple of 16 (bf16 sublane packing), at most `tile_b`.
    gran = 16
    tb = min(tile_b, _round_up(B, gran))
    if B >= 2 * gran:
        # Ensure >= 2 grid steps so the "parallel" batch axis can be split
        # across v7x's two TensorCores (no-op on single-TC v5e/v6e).
        tb = min(tb, _round_up(-(-B // 2), gran))
    b_pad = _round_up(B, tb)
    if b_pad != B:
        x = jnp.pad(x, ((0, b_pad - B), (0, 0)))

    grid = (b_pad // tb,)

    # Weights / biases: constant block index -> VMEM-resident across the grid.
    const = lambda i: (0, 0)
    grid_spec = pltpu.PrefetchScalarGridSpec(
        num_scalar_prefetch=0,
        grid=grid,
        in_specs=[
            pl.BlockSpec((tb, dim_state), lambda i: (i, 0)),      # x tile (f32)
            pl.BlockSpec((dim_state, HIDDEN), const),             # w1 (bf16)
            pl.BlockSpec((1, HIDDEN), const),                     # b1 (f32)
            pl.BlockSpec((HIDDEN, HIDDEN), const),                # w2 (bf16)
            pl.BlockSpec((1, HIDDEN), const),                     # b2 (f32)
            pl.BlockSpec((HIDDEN, HIDDEN), const),                # w3 (bf16)
            pl.BlockSpec((1, HIDDEN), const),                     # b3 (f32)
            pl.BlockSpec((HIDDEN, 2), const),                     # fused head W (bf16)
            pl.BlockSpec((1, 2), const),                          # fused head b (f32)
        ],
        out_specs=pl.BlockSpec((tb, 2), lambda i: (i, 0)),
    )

    out = pl.pallas_call(
        actor_kernel,
        out_shape=jax.ShapeDtypeStruct((b_pad, 2), jnp.float32),
        grid_spec=grid_spec,
        compiler_params=pltpu.CompilerParams(
            dimension_semantics=("parallel",)),
    )(x, w1, b1, w2, b2, w3, b3, wh, bh)

    lin_vel = out[:B, 0:1]
    ang_vel = out[:B, 1:2]
    return lin_vel, ang_vel


def init_params(key, dim_state):
    """Deterministic init mirroring reset_parameters(): U(-1/sqrt(fan_in), +)."""
    def linear(k, fan_in, fan_out):
        kw, kb = jax.random.split(k)
        bound = 1.0 / jnp.sqrt(jnp.float32(fan_in))
        w = jax.random.uniform(kw, (fan_in, fan_out), jnp.float32, -bound, bound)
        b = jax.random.uniform(kb, (1, fan_out), jnp.float32, -bound, bound)
        return w, b

    k1, k2, k3, k4, k5 = jax.random.split(key, 5)
    w1, b1 = linear(k1, dim_state, HIDDEN)
    w2, b2 = linear(k2, HIDDEN, HIDDEN)
    w3, b3 = linear(k3, HIDDEN, HIDDEN)
    wl, bl = linear(k4, HIDDEN, 1)
    wa, ba = linear(k5, HIDDEN, 1)
    return (w1, b1, w2, b2, w3, b3, wl, bl, wa, ba)


def prepare_params(params):
    """One-time (out of the hot path): fuse the two heads, cast weights to bf16."""
    (w1, b1, w2, b2, w3, b3, wl, bl, wa, ba) = params
    wh = jnp.concatenate([wl, wa], axis=1)        # (512, 2): col0=Lin, col1=Ang
    bh = jnp.concatenate([bl, ba], axis=1)        # (1, 2)
    return (w1.astype(jnp.bfloat16), b1,
            w2.astype(jnp.bfloat16), b2,
            w3.astype(jnp.bfloat16), b3,
            wh.astype(jnp.bfloat16), bh)


def reference_forward(x, prepared_params):
    """Pure-JAX reference using the identical bf16 operand precision."""
    w1, b1, w2, b2, w3, b3, wh, bh = prepared_params
    h = jnp.dot(x.astype(jnp.bfloat16), w1,
                preferred_element_type=jnp.float32) + b1
    h = jnp.maximum(h, 0.0)
    h = jnp.dot(h.astype(jnp.bfloat16), w2,
                preferred_element_type=jnp.float32) + b2
    h = jnp.maximum(h, 0.0)
    h = jnp.dot(h.astype(jnp.bfloat16), w3,
                preferred_element_type=jnp.float32) + b3
    h = jnp.maximum(h, 0.0)
    o = jnp.dot(h.astype(jnp.bfloat16), wh,
                preferred_element_type=jnp.float32) + bh
    return jax.nn.sigmoid(o[:, 0:1]), jnp.tanh(o[:, 1:2])


if __name__ == "__main__":
    DIM_STATE = 16
    BATCH = 2

    key = jax.random.PRNGKey(0)
    kx, kp = jax.random.split(key)
    x = jax.random.normal(kx, (BATCH, DIM_STATE), jnp.float32)
    params = init_params(kp, DIM_STATE)
    prepared = prepare_params(params)   # bf16 cast + head fusion, hoisted

    lin_vel, ang_vel = actor_forward(x, prepared)
    jax.block_until_ready((lin_vel, ang_vel))

    ref_lin, ref_ang = reference_forward(x, prepared)
    assert lin_vel.shape == (BATCH, 1) and ang_vel.shape == (BATCH, 1)
    assert jnp.allclose(lin_vel, ref_lin, atol=2e-3, rtol=2e-3)
    assert jnp.allclose(ang_vel, ref_ang, atol=2e-3, rtol=2e-3)

    # TODO(synk): bn1 (BatchNorm1d) is never invoked in the PyTorch forward,
    # so it is intentionally omitted here.
    print("KERNEL_OK")
</pallas_src>

<mosaic_0001>
module attributes {stable_mosaic.version = 11 : i64} {
  func.func @actor_kernel(%arg0: i32, %arg1: memref<16x16xf32, #tpu.memory_space<vmem>>, %arg2: memref<16x512xbf16, #tpu.memory_space<vmem>>, %arg3: memref<1x512xf32, #tpu.memory_space<vmem>>, %arg4: memref<512x512xbf16, #tpu.memory_space<vmem>>, %arg5: memref<1x512xf32, #tpu.memory_space<vmem>>, %arg6: memref<512x512xbf16, #tpu.memory_space<vmem>>, %arg7: memref<1x512xf32, #tpu.memory_space<vmem>>, %arg8: memref<512x2xbf16, #tpu.memory_space<vmem>>, %arg9: memref<1x2xf32, #tpu.memory_space<vmem>>, %arg10: memref<16x2xf32, #tpu.memory_space<vmem>>) attributes {dimension_semantics = [#tpu.dimension_semantics<parallel>], iteration_bounds = array<i64: 1>, scalar_prefetch = 0 : i64, scratch_operands = 0 : i64, tpu.core_type = #tpu.core_type<tc>, window_params = [{transform_indices = @transform_0, window_bounds = array<i64: 16, 16>}, {pipeline_mode = #tpu.pipeline_mode<synchronous>, transform_indices = @transform_1, window_bounds = array<i64: 16, 512>}, {pipeline_mode = #tpu.pipeline_mode<synchronous>, transform_indices = @transform_2, window_bounds = array<i64: 1, 512>}, {pipeline_mode = #tpu.pipeline_mode<synchronous>, transform_indices = @transform_3, window_bounds = array<i64: 512, 512>}, {pipeline_mode = #tpu.pipeline_mode<synchronous>, transform_indices = @transform_4, window_bounds = array<i64: 1, 512>}, {pipeline_mode = #tpu.pipeline_mode<synchronous>, transform_indices = @transform_5, window_bounds = array<i64: 512, 512>}, {pipeline_mode = #tpu.pipeline_mode<synchronous>, transform_indices = @transform_6, window_bounds = array<i64: 1, 512>}, {pipeline_mode = #tpu.pipeline_mode<synchronous>, transform_indices = @transform_7, window_bounds = array<i64: 512, 2>}, {pipeline_mode = #tpu.pipeline_mode<synchronous>, transform_indices = @transform_8, window_bounds = array<i64: 1, 2>}, {transform_indices = @transform_9, window_bounds = array<i64: 16, 2>}]} {
    %c0 = arith.constant 0 : index
    %c0_0 = arith.constant 0 : index
    %0 = vector.load %arg1[%c0, %c0_0] : memref<16x16xf32, #tpu.memory_space<vmem>>, vector<16x16xf32>
    %1 = arith.truncf %0 : vector<16x16xf32> to vector<16x16xbf16>
    %c0_1 = arith.constant 0 : index
    %c0_2 = arith.constant 0 : index
    %2 = vector.load %arg2[%c0_1, %c0_2] : memref<16x512xbf16, #tpu.memory_space<vmem>>, vector<16x512xbf16>
    %cst = arith.constant dense<0.000000e+00> : vector<16x512xf32>
    %3 = tpu.matmul %1, %2, %cst {dimension_numbers = #tpu.dot_dimension_numbers<[1], [0], [0], [1], [0, 0, 1, 1], [], []>} : vector<16x16xbf16>, vector<16x512xbf16>, vector<16x512xf32> -> vector<16x512xf32>
    %c0_3 = arith.constant 0 : index
    %c0_4 = arith.constant 0 : index
    %4 = vector.load %arg3[%c0_3, %c0_4] : memref<1x512xf32, #tpu.memory_space<vmem>>, vector<1x512xf32>
    %5 = vector.broadcast %4 : vector<1x512xf32> to vector<16x512xf32>
    %6 = arith.addf %3, %5 : vector<16x512xf32>
    %cst_5 = arith.constant 0.000000e+00 : f32
    %7 = vector.broadcast %cst_5 : f32 to vector<16x512xf32>
    %8 = arith.maximumf %6, %7 : vector<16x512xf32>
    %9 = arith.truncf %8 : vector<16x512xf32> to vector<16x512xbf16>
    %c0_6 = arith.constant 0 : index
    %c0_7 = arith.constant 0 : index
    %10 = vector.load %arg4[%c0_6, %c0_7] : memref<512x512xbf16, #tpu.memory_space<vmem>>, vector<512x512xbf16>
    %cst_8 = arith.constant dense<0.000000e+00> : vector<16x512xf32>
    %11 = tpu.matmul %9, %10, %cst_8 {dimension_numbers = #tpu.dot_dimension_numbers<[1], [0], [0], [1], [0, 0, 1, 1], [], []>} : vector<16x512xbf16>, vector<512x512xbf16>, vector<16x512xf32> -> vector<16x512xf32>
    %c0_9 = arith.constant 0 : index
    %c0_10 = arith.constant 0 : index
    %12 = vector.load %arg5[%c0_9, %c0_10] : memref<1x512xf32, #tpu.memory_space<vmem>>, vector<1x512xf32>
    %13 = vector.broadcast %12 : vector<1x512xf32> to vector<16x512xf32>
    %14 = arith.addf %11, %13 : vector<16x512xf32>
    %cst_11 = arith.constant 0.000000e+00 : f32
    %15 = vector.broadcast %cst_11 : f32 to vector<16x512xf32>
    %16 = arith.maximumf %14, %15 : vector<16x512xf32>
    %17 = arith.truncf %16 : vector<16x512xf32> to vector<16x512xbf16>
    %c0_12 = arith.constant 0 : index
    %c0_13 = arith.constant 0 : index
    %18 = vector.load %arg6[%c0_12, %c0_13] : memref<512x512xbf16, #tpu.memory_space<vmem>>, vector<512x512xbf16>
    %cst_14 = arith.constant dense<0.000000e+00> : vector<16x512xf32>
    %19 = tpu.matmul %17, %18, %cst_14 {dimension_numbers = #tpu.dot_dimension_numbers<[1], [0], [0], [1], [0, 0, 1, 1], [], []>} : vector<16x512xbf16>, vector<512x512xbf16>, vector<16x512xf32> -> vector<16x512xf32>
    %c0_15 = arith.constant 0 : index
    %c0_16 = arith.constant 0 : index
    %20 = vector.load %arg7[%c0_15, %c0_16] : memref<1x512xf32, #tpu.memory_space<vmem>>, vector<1x512xf32>
    %21 = vector.broadcast %20 : vector<1x512xf32> to vector<16x512xf32>
    %22 = arith.addf %19, %21 : vector<16x512xf32>
    %cst_17 = arith.constant 0.000000e+00 : f32
    %23 = vector.broadcast %cst_17 : f32 to vector<16x512xf32>
    %24 = arith.maximumf %22, %23 : vector<16x512xf32>
    %25 = arith.truncf %24 : vector<16x512xf32> to vector<16x512xbf16>
    %c0_18 = arith.constant 0 : index
    %c0_19 = arith.constant 0 : index
    %26 = vector.load %arg8[%c0_18, %c0_19] : memref<512x2xbf16, #tpu.memory_space<vmem>>, vector<512x2xbf16>
    %cst_20 = arith.constant dense<0.000000e+00> : vector<16x2xf32>
    %27 = tpu.matmul %25, %26, %cst_20 {dimension_numbers = #tpu.dot_dimension_numbers<[1], [0], [0], [1], [0, 0, 1, 1], [], []>} : vector<16x512xbf16>, vector<512x2xbf16>, vector<16x2xf32> -> vector<16x2xf32>
    %c0_21 = arith.constant 0 : index
    %c0_22 = arith.constant 0 : index
    %28 = vector.load %arg9[%c0_21, %c0_22] : memref<1x2xf32, #tpu.memory_space<vmem>>, vector<1x2xf32>
    %29 = vector.broadcast %28 : vector<1x2xf32> to vector<16x2xf32>
    %30 = arith.addf %27, %29 : vector<16x2xf32>
    %31 = tpu.iota {dimensions = array<i32: 1>} : vector<16x2xi32>
    %c0_i32 = arith.constant 0 : i32
    %32 = vector.broadcast %c0_i32 : i32 to vector<16x2xi32>
    %33 = arith.cmpi eq, %31, %32 : vector<16x2xi32>
    %34 = arith.negf %30 : vector<16x2xf32>
    %35 = math.exp %34 : vector<16x2xf32>
    %cst_23 = arith.constant 1.000000e+00 : f32
    %36 = vector.broadcast %cst_23 : f32 to vector<16x2xf32>
    %37 = arith.addf %36, %35 : vector<16x2xf32>
    %38 = arith.divf %36, %37 : vector<16x2xf32>
    %39 = math.tanh %30 : vector<16x2xf32>
    %40 = arith.select %33, %38, %39 : vector<16x2xi1>, vector<16x2xf32>
    %c0_24 = arith.constant 0 : index
    %c0_25 = arith.constant 0 : index
    %41 = vector.load %arg10[%c0_24, %c0_25] : memref<16x2xf32, #tpu.memory_space<vmem>>, vector<16x2xf32>
    tpu.vector_store %arg10[%c0_24, %c0_25], %40 {strides = array<i32>} : memref<16x2xf32, #tpu.memory_space<vmem>>, vector<16x2xf32>,
    return
  }
  func.func @transform_0(%arg0: i32) -> (i32, i32) {
    %c0_i32 = arith.constant 0 : i32
    %c0_i32_0 = arith.constant 0 : i32
    return %arg0, %c0_i32 : i32, i32
  }
  func.func @transform_1(%arg0: i32) -> (i32, i32) {
    %c0_i32 = arith.constant 0 : i32
    %c0_i32_0 = arith.constant 0 : i32
    %c0_i32_1 = arith.constant 0 : i32
    return %c0_i32, %c0_i32_0 : i32, i32
  }
  func.func @transform_2(%arg0: i32) -> (i32, i32) {
    %c0_i32 = arith.constant 0 : i32
    %c0_i32_0 = arith.constant 0 : i32
    %c0_i32_1 = arith.constant 0 : i32
    return %c0_i32, %c0_i32_0 : i32, i32
  }
  func.func @transform_3(%arg0: i32) -> (i32, i32) {
    %c0_i32 = arith.constant 0 : i32
    %c0_i32_0 = arith.constant 0 : i32
    %c0_i32_1 = arith.constant 0 : i32
    return %c0_i32, %c0_i32_0 : i32, i32
  }
  func.func @transform_4(%arg0: i32) -> (i32, i32) {
    %c0_i32 = arith.constant 0 : i32
    %c0_i32_0 = arith.constant 0 : i32
    %c0_i32_1 = arith.constant 0 : i32
    return %c0_i32, %c0_i32_0 : i32, i32
  }
  func.func @transform_5(%arg0: i32) -> (i32, i32) {
    %c0_i32 = arith.constant 0 : i32
    %c0_i32_0 = arith.constant 0 : i32
    %c0_i32_1 = arith.constant 0 : i32
    return %c0_i32, %c0_i32_0 : i32, i32
  }
  func.func @transform_6(%arg0: i32) -> (i32, i32) {
    %c0_i32 = arith.constant 0 : i32
    %c0_i32_0 = arith.constant 0 : i32
    %c0_i32_1 = arith.constant 0 : i32
    return %c0_i32, %c0_i32_0 : i32, i32
  }
  func.func @transform_7(%arg0: i32) -> (i32, i32) {
    %c0_i32 = arith.constant 0 : i32
    %c0_i32_0 = arith.constant 0 : i32
    %c0_i32_1 = arith.constant 0 : i32
    return %c0_i32, %c0_i32_0 : i32, i32
  }
  func.func @transform_8(%arg0: i32) -> (i32, i32) {
    %c0_i32 = arith.constant 0 : i32
    %c0_i32_0 = arith.constant 0 : i32
    %c0_i32_1 = arith.constant 0 : i32
    return %c0_i32, %c0_i32_0 : i32, i32
  }
  func.func @transform_9(%arg0: i32) -> (i32, i32) {
    %c0_i32 = arith.constant 0 : i32
    %c0_i32_0 = arith.constant 0 : i32
    return %arg0, %c0_i32 : i32, i32
  }
}

</mosaic_0001>

<llo_original>
// kernel: actor_forward.1
$region0: #{actor_forward.1}
  #allocation0 [shape = 'u32[]', space=smem, size = 0x4, offset = 0x4, fixed_abs, tag = 'smem constant byte address 0x4 - core index']
  #allocation1 [shape = 'u32[72,128]{1,0:T(1,128)}', space=vmem, size = 0x9000, scoped, tag = 'internal scratch']
  %s0 = inlined_call_operand.vmem [shape: f32[16,16], index: 0, kind: input, shape index: {}]
  %s1 = inlined_call_operand.vmem [shape: bf16[16,512], index: 1, kind: input, shape index: {}]
  %s2 = inlined_call_operand.vmem [shape: f32[1,512], index: 2, kind: input, shape index: {}]
  %s3 = inlined_call_operand.hbm [shape: bf16[512,512], index: 3, kind: input, shape index: {}]
  %s4 = inlined_call_operand.vmem [shape: f32[1,512], index: 4, kind: input, shape index: {}]
  %s5 = inlined_call_operand.hbm [shape: bf16[512,512], index: 5, kind: input, shape index: {}]
  %s6 = inlined_call_operand.vmem [shape: f32[1,512], index: 6, kind: input, shape index: {}]
  %s7 = inlined_call_operand.vmem [shape: bf16[512,2], index: 7, kind: input, shape index: {}]
  %s8 = inlined_call_operand.vmem [shape: f32[1,2], index: 8, kind: input, shape index: {}]
  %s9 = inlined_call_operand.vmem [shape: f32[16,2], index: 9, kind: output, shape index: {}]
  %s10 = sld [smem:[#allocation0]]
  $region54: #{actor_forward.1} parent=0
    _
  %s12 = ssub.s32 1, %s10
  %s13 = scalar_select 0, %s12, %s10
  $region1: #{actor_forward.1} parent=0
    #allocation2 [shape = 'u8[524288]{0}', space=vmem, size = 0x80000, scoped, tag = 'input window, operand 3, single buffered']
    #allocation3 [shape = 's32[1]{0}', space=sflag, size = 0x4, scoped, tag = 'scoped memory for actor_forward.1']
    #allocation4 [shape = 'u8[524288]{0}', space=vmem, size = 0x80000, scoped, tag = 'input window, operand 5, single buffered']
    #allocation5 [shape = 's32[1]{0}', space=sflag, size = 0x4, scoped, tag = 'scoped memory for actor_forward.1']
    %14 = vsyncpa [#allocation3], 0
    %15 = vsyncpa [#allocation5], 0
    // Predicated region
    $region2: #{actor_forward.1} parent=1 // pred_check
      _
    $region3: #{actor_forward.1} parent=1 // pred_check_branch
      %17 = sbr.rel (0) target = $region5
    $region4: #{actor_forward.1} parent=1 // pred_region
      _
    $region5: #{actor_forward.1} parent=1 // pred_fallthru
      _
    // Predicated region
    $region6: #{actor_forward.1} parent=1 // pred_check
      _
    $region7: #{actor_forward.1} parent=1 // pred_check_branch
      %19 = sbr.rel (0) target = $region9
    $region8: #{actor_forward.1} parent=1 // pred_region
      _
    $region9: #{actor_forward.1} parent=1 // pred_fallthru
      _
    // Predicated region
    $region10: #{actor_forward.1} parent=1 // pred_check
      _
    $region11: #{actor_forward.1} parent=1 // pred_check_branch
      %21 = sbr.rel (0) target = $region13
    $region12: #{actor_forward.1} parent=1 // pred_region
      _
    $region13: #{actor_forward.1} parent=1 // pred_fallthru
      _
    // Predicated region
    $region14: #{actor_forward.1} parent=1 // pred_check
      _
    $region15: #{actor_forward.1} parent=1 // pred_check_branch
      %23 = sbr.rel (0) target = $region17
    $region16: #{actor_forward.1} parent=1 // pred_region
      %25 = vsyncadd [#allocation3], 0
      %s26 = sshll.u32 %s3, 4
      %s27 = int_to_ptr.hbm [resolvable:$true] %s26
      %s28 = sshll.u32 [#allocation2], 4
      %s29 = int_to_ptr.vmem [resolvable:$true] %s28
      %34 = dma.hbm_to_vmem [thread:$0]  %s27, 16384, %s29, [#allocation3], 256, 256, 16
    $region17: #{actor_forward.1} parent=1 // pred_fallthru
      _
    // Predicated region
    $region18: #{actor_forward.1} parent=1 // pred_check
      _
    $region19: #{actor_forward.1} parent=1 // pred_check_branch
      %36 = sbr.rel (0) target = $region21
    $region20: #{actor_forward.1} parent=1 // pred_region
      _
    $region21: #{actor_forward.1} parent=1 // pred_fallthru
      _
    // Predicated region
    $region22: #{actor_forward.1} parent=1 // pred_check
      _
    $region23: #{actor_forward.1} parent=1 // pred_check_branch
      %38 = sbr.rel (0) target = $region25
    $region24: #{actor_forward.1} parent=1 // pred_region
      %40 = vsyncadd [#allocation5], 0
      %s41 = sshll.u32 %s5, 4
      %s42 = int_to_ptr.hbm [resolvable:$true] %s41
      %s43 = sshll.u32 [#allocation4], 4
      %s44 = int_to_ptr.vmem [resolvable:$true] %s43
      %49 = dma.hbm_to_vmem [thread:$0]  %s42, 16384, %s44, [#allocation5], 256, 256, 16
    $region25: #{actor_forward.1} parent=1 // pred_fallthru
      _
    // Predicated region
    $region26: #{actor_forward.1} parent=1 // pred_check
      _
    $region27: #{actor_forward.1} parent=1 // pred_check_branch
      %51 = sbr.rel (0) target = $region29
    $region28: #{actor_forward.1} parent=1 // pred_region
      _
    $region29: #{actor_forward.1} parent=1 // pred_fallthru
      _
    // Predicated region
    $region30: #{actor_forward.1} parent=1 // pred_check
      _
    $region31: #{actor_forward.1} parent=1 // pred_check_branch
      %53 = sbr.rel (0) target = $region33
    $region32: #{actor_forward.1} parent=1 // pred_region
      _
    $region33: #{actor_forward.1} parent=1 // pred_fallthru
      _
    // Predicated region
    $region34: #{actor_forward.1} parent=1 // pred_check
      _
    $region35: #{actor_forward.1} parent=1 // pred_check_branch
      %55 = sbr.rel (0) target = $region37
    $region36: #{actor_forward.1} parent=1 // pred_region
      _
    $region37: #{actor_forward.1} parent=1 // pred_fallthru
      _
    // Predicated region
    $region38: #{actor_forward.1} parent=1 // pred_check
      _
    $region39: #{actor_forward.1} parent=1 // pred_check_branch
      %57 = sbr.rel (0) target = $region41
    $region40: #{actor_forward.1} parent=1 // pred_region
      %59 = dma.done [#allocation3], 16384
    $region41: #{actor_forward.1} parent=1 // pred_fallthru
      _
    // Predicated region
    $region42: #{actor_forward.1} parent=1 // pred_check
      _
    $region43: #{actor_forward.1} parent=1 // pred_check_branch
      %61 = sbr.rel (0) target = $region45
    $region44: #{actor_forward.1} parent=1 // pred_region
      %63 = dma.done [#allocation5], 16384
    $region45: #{actor_forward.1} parent=1 // pred_fallthru
      _
    %v65 = vld [vmem:[%s0] sm:$0xff]
    %v66 = vld [vmem:[%s0 + $0x8] sm:$0xff]
    %v67 = vpack.c.bf16 %v66, %v65
    %v68 = vld [vmem:[%s1] sm:$0xff]
    %v69 = vld [vmem:[%s1 + $0x8] sm:$0xff]
    %v70 = vld [vmem:[%s1 + $0x10] sm:$0xff]
    %v71 = vld [vmem:[%s1 + $0x18] sm:$0xff]
    %v72 = vld [vmem:[%s2] sm:$0xf]
    %v74 = vperm.slane %v72, 0
    %v75 = vperm.slane %v72, 1
    %v76 = vperm.slane %v72, 2
    %v77 = vperm.slane %v72, 3
    %v86 = vunpack.c.l.b16 %v68
    %v87 = vunpack.c.h.b16 %v68
    %v88 = vunpack.c.l.b16 %v69
    %v89 = vunpack.c.h.b16 %v69
    %v90 = vunpack.c.l.b16 %v70
    %v91 = vunpack.c.h.b16 %v70
    %v92 = vunpack.c.l.b16 %v71
    %v93 = vunpack.c.h.b16 %v71
    %v94 = vpack.c.b16 %v90, %v86
    %v95 = vpack.c.b16 %v91, %v87
    %v96 = vpack.c.b16 %v92, %v88
    %v97 = vpack.c.b16 %v93, %v89
    %vm102 = vcmask 130048
    %v104 = vsel %vm102, %v67, 0
    %106 = vmatpush.bf16.msra.mxu0 0
    %107 = vmatpush.bf16.msra.mxu0 0
    %108 = vmatpush.bf16.msra.mxu0 0
    %109 = vmatpush.bf16.msra.mxu0 0
    %110 = vmatpush.bf16.msra.mxu0 0
    %111 = vmatpush.bf16.msra.mxu0 0
    %112 = vmatpush.bf16.msra.mxu0 0
    %113 = vmatpush.bf16.msra.mxu0 %v94
    %114 = vmatmul.bf16.gmra.mxu0 %v104
    %v115 = vpop.f32.mrf.mxu0
    %v116 = vadd.f32 %v74, %v115
    %v117 = vpop.f32.mrf.mxu0
    %v118 = vadd.f32 %v74, %v117
    %119 = vdwg.mxu0
    %120 = vmatpush.bf16.msra.mxu0 0
    %121 = vmatpush.bf16.msra.mxu0 0
    %122 = vmatpush.bf16.msra.mxu0 0
    %123 = vmatpush.bf16.msra.mxu0 0
    %124 = vmatpush.bf16.msra.mxu0 0
    %125 = vmatpush.bf16.msra.mxu0 0
    %126 = vmatpush.bf16.msra.mxu0 0
    %127 = vmatpush.bf16.msra.mxu0 %v95
    %128 = vmatmul.bf16.gmra.mxu0 %v104
    %v129 = vpop.f32.mrf.mxu0
    %v130 = vadd.f32 %v75, %v129
    %v131 = vpop.f32.mrf.mxu0
    %v132 = vadd.f32 %v75, %v131
    %133 = vdwg.mxu0
    %134 = vmatpush.bf16.msra.mxu0 0
    %135 = vmatpush.bf16.msra.mxu0 0
    %136 = vmatpush.bf16.msra.mxu0 0
    %137 = vmatpush.bf16.msra.mxu0 0
    %138 = vmatpush.bf16.msra.mxu0 0
    %139 = vmatpush.bf16.msra.mxu0 0
    %140 = vmatpush.bf16.msra.mxu0 0
    %141 = vmatpush.bf16.msra.mxu0 %v96
    %142 = vmatmul.bf16.gmra.mxu0 %v104
    %v143 = vpop.f32.mrf.mxu0
    %v144 = vadd.f32 %v76, %v143
    %v145 = vpop.f32.mrf.mxu0
    %v146 = vadd.f32 %v76, %v145
    %147 = vdwg.mxu0
    %148 = vmatpush.bf16.msra.mxu0 0
    %149 = vmatpush.bf16.msra.mxu0 0
    %150 = vmatpush.bf16.msra.mxu0 0
    %151 = vmatpush.bf16.msra.mxu0 0
    %152 = vmatpush.bf16.msra.mxu0 0
    %153 = vmatpush.bf16.msra.mxu0 0
    %154 = vmatpush.bf16.msra.mxu0 0
    %155 = vmatpush.bf16.msra.mxu0 %v97
    %156 = vmatmul.bf16.gmra.mxu0 %v104
    %v157 = vpop.f32.mrf.mxu0
    %v158 = vadd.f32 %v77, %v157
    %v159 = vpop.f32.mrf.mxu0
    %v160 = vadd.f32 %v77, %v159
    %161 = vdwg.mxu0
    %v162 = vmax.f32 %v116, 0.0
    %v163 = vmax.f32 %v130, 0.0
    %v164 = vmax.f32 %v144, 0.0
    %v165 = vmax.f32 %v158, 0.0
    %v166 = vmax.f32 %v118, 0.0
    %v167 = vmax.f32 %v132, 0.0
    %v168 = vmax.f32 %v146, 0.0
    %v169 = vmax.f32 %v160, 0.0
    %v170 = vpack.c.bf16 %v166, %v162
    %v171 = vpack.c.bf16 %v167, %v163
    %v172 = vpack.c.bf16 %v168, %v164
    %v173 = vpack.c.bf16 %v169, %v165
    %v174 = vld [vmem:[#allocation2] sm:$0xff]
    %v175 = vld [vmem:[#allocation2 + $0x8] sm:$0xff]
    %v176 = vld [vmem:[#allocation2 + $0x10] sm:$0xff]
    %v177 = vld [vmem:[#allocation2 + $0x18] sm:$0xff]
    %v178 = vld [vmem:[#allocation2 + $0x20] sm:$0xff]
    %v179 = vld [vmem:[#allocation2 + $0x28] sm:$0xff]
    %v180 = vld [vmem:[#allocation2 + $0x30] sm:$0xff]
    %v181 = vld [vmem:[#allocation2 + $0x38] sm:$0xff]
    %v182 = vld [vmem:[#allocation2 + $0x40] sm:$0xff]
    %v183 = vld [vmem:[#allocation2 + $0x48] sm:$0xff]
    %v184 = vld [vmem:[#allocation2 + $0x50] sm:$0xff]
    %v185 = vld [vmem:[#allocation2 + $0x58] sm:$0xff]
    %v186 = vld [vmem:[#allocation2 + $0x60] sm:$0xff]
    %v187 = vld [vmem:[#allocation2 + $0x68] sm:$0xff]
    %v188 = vld [vmem:[#allocation2 + $0x70] sm:$0xff]
    %v189 = vld [vmem:[#allocation2 + $0x78] sm:$0xff]
    %v190 = vld [vmem:[#allocation2 + $0x80] sm:$0xff]
    %v191 = vld [vmem:[#allocation2 + $0x88] sm:$0xff]
    %v192 = vld [vmem:[#allocation2 + $0x90] sm:$0xff]
    %v193 = vld [vmem:[#allocation2 + $0x98] sm:$0xff]
    %v194 = vld [vmem:[#allocation2 + $0xa0] sm:$0xff]
    %v195 = vld [vmem:[#allocation2 + $0xa8] sm:$0xff]
    %v196 = vld [vmem:[#allocation2 + $0xb0] sm:$0xff]
    %v197 = vld [vmem:[#allocation2 + $0xb8] sm:$0xff]
    %v198 = vld [vmem:[#allocation2 + $0xc0] sm:$0xff]
    %v199 = vld [vmem:[#allocation2 + $0xc8] sm:$0xff]
    %v200 = vld [vmem:[#allocation2 + $0xd0] sm:$0xff]
    %v201 = vld [vmem:[#allocation2 + $0xd8] sm:$0xff]
    %v202 = vld [vmem:[#allocation2 + $0xe0] sm:$0xff]
    %v203 = vld [vmem:[#allocation2 + $0xe8] sm:$0xff]
    %v204 = vld [vmem:[#allocation2 + $0xf0] sm:$0xff]
    %v205 = vld [vmem:[#allocation2 + $0xf8] sm:$0xff]
    %v206 = vld [vmem:[#allocation2 + $0x100] sm:$0xff]
    %v207 = vld [vmem:[#allocation2 + $0x108] sm:$0xff]
    %v208 = vld [vmem:[#allocation2 + $0x110] sm:$0xff]
    %v209 = vld [vmem:[#allocation2 + $0x118] sm:$0xff]
    %v210 = vld [vmem:[#allocation2 + $0x120] sm:$0xff]
    %v211 = vld [vmem:[#allocation2 + $0x128] sm:$0xff]
    %v212 = vld [vmem:[#allocation2 + $0x130] sm:$0xff]
    %v213 = vld [vmem:[#allocation2 + $0x138] sm:$0xff]
    %v214 = vld [vmem:[#allocation2 + $0x140] sm:$0xff]
    %v215 = vld [vmem:[#allocation2 + $0x148] sm:$0xff]
    %v216 = vld [vmem:[#allocation2 + $0x150] sm:$0xff]
    %v217 = vld [vmem:[#allocation2 + $0x158] sm:$0xff]
    %v218 = vld [vmem:[#allocation2 + $0x160] sm:$0xff]
    %v219 = vld [vmem:[#allocation2 + $0x168] sm:$0xff]
    %v220 = vld [vmem:[#allocation2 + $0x170] sm:$0xff]
    %v221 = vld [vmem:[#allocation2 + $0x178] sm:$0xff]
    %v222 = vld [vmem:[#allocation2 + $0x180] sm:$0xff]
    %v223 = vld [vmem:[#allocation2 + $0x188] sm:$0xff]
    %v224 = vld [vmem:[#allocation2 + $0x190] sm:$0xff]
    %v225 = vld [vmem:[#allocation2 + $0x198] sm:$0xff]
    %v226 = vld [vmem:[#allocation2 + $0x1a0] sm:$0xff]
    %v227 = vld [vmem:[#allocation2 + $0x1a8] sm:$0xff]
    %v228 = vld [vmem:[#allocation2 + $0x1b0] sm:$0xff]
    %v229 = vld [vmem:[#allocation2 + $0x1b8] sm:$0xff]
    %v230 = vld [vmem:[#allocation2 + $0x1c0] sm:$0xff]
    %v231 = vld [vmem:[#allocation2 + $0x1c8] sm:$0xff]
    %v232 = vld [vmem:[#allocation2 + $0x1d0] sm:$0xff]
    %v233 = vld [vmem:[#allocation2 + $0x1d8] sm:$0xff]
    %v234 = vld [vmem:[#allocation2 + $0x1e0] sm:$0xff]
    %v235 = vld [vmem:[#allocation2 + $0x1e8] sm:$0xff]
    %v236 = vld [vmem:[#allocation2 + $0x1f0] sm:$0xff]
    %v237 = vld [vmem:[#allocation2 + $0x1f8] sm:$0xff]
    %v238 = vld [vmem:[#allocation2 + $0x200] sm:$0xff]
    %v239 = vld [vmem:[#allocation2 + $0x208] sm:$0xff]
    %v240 = vld [vmem:[#allocation2 + $0x210] sm:$0xff]
    %v241 = vld [vmem:[#allocation2 + $0x218] sm:$0xff]
    %v242 = vld [vmem:[#allocation2 + $0x220] sm:$0xff]
    %v243 = vld [vmem:[#allocation2 + $0x228] sm:$0xff]
    %v244 = vld [vmem:[#allocation2 + $0x230] sm:$0xff]
    %v245 = vld [vmem:[#allocation2 + $0x238] sm:$0xff]
    %v246 = vld [vmem:[#allocation2 + $0x240] sm:$0xff]
    %v247 = vld [vmem:[#allocation2 + $0x248] sm:$0xff]
    %v248 = vld [vmem:[#allocation2 + $0x250] sm:$0xff]
    %v249 = vld [vmem:[#allocation2 + $0x258] sm:$0xff]
    %v250 = vld [vmem:[#allocation2 + $0x260] sm:$0xff]
    %v251 = vld [vmem:[#allocation2 + $0x268] sm:$0xff]
    %v252 = vld [vmem:[#allocation2 + $0x270] sm:$0xff]
    %v253 = vld [vmem:[#allocation2 + $0x278] sm:$0xff]
    %v254 = vld [vmem:[#allocation2 + $0x280] sm:$0xff]
    %v255 = vld [vmem:[#allocation2 + $0x288] sm:$0xff]
    %v256 = vld [vmem:[#allocation2 + $0x290] sm:$0xff]
    %v257 = vld [vmem:[#allocation2 + $0x298] sm:$0xff]
    %v258 = vld [vmem:[#allocation2 + $0x2a0] sm:$0xff]
    %v259 = vld [vmem:[#allocation2 + $0x2a8] sm:$0xff]
    %v260 = vld [vmem:[#allocation2 + $0x2b0] sm:$0xff]
    %v261 = vld [vmem:[#allocation2 + $0x2b8] sm:$0xff]
    %v262 = vld [vmem:[#allocation2 + $0x2c0] sm:$0xff]
    %v263 = vld [vmem:[#allocation2 + $0x2c8] sm:$0xff]
    %v264 = vld [vmem:[#allocation2 + $0x2d0] sm:$0xff]
    %v265 = vld [vmem:[#allocation2 + $0x2d8] sm:$0xff]
    %v266 = vld [vmem:[#allocation2 + $0x2e0] sm:$0xff]
    %v267 = vld [vmem:[#allocation2 + $0x2e8] sm:$0xff]
    %v268 = vld [vmem:[#allocation2 + $0x2f0] sm:$0xff]
    %v269 = vld [vmem:[#allocation2 + $0x2f8] sm:$0xff]
    %v270 = vld [vmem:[#allocation2 + $0x300] sm:$0xff]
    %v271 = vld [vmem:[#allocation2 + $0x308] sm:$0xff]
    %v272 = vld [vmem:[#allocation2 + $0x310] sm:$0xff]
    %v273 = vld [vmem:[#allocation2 + $0x318] sm:$0xff]
    %v274 = vld [vmem:[#allocation2 + $0x320] sm:$0xff]
    %v275 = vld [vmem:[#allocation2 + $0x328] sm:$0xff]
    %v276 = vld [vmem:[#allocation2 + $0x330] sm:$0xff]
    %v277 = vld [vmem:[#allocation2 + $0x338] sm:$0xff]
    %v278 = vld [vmem:[#allocation2 + $0x340] sm:$0xff]
    %v279 = vld [vmem:[#allocation2 + $0x348] sm:$0xff]
    %v280 = vld [vmem:[#allocation2 + $0x350] sm:$0xff]
    %v281 = vld [vmem:[#allocation2 + $0x358] sm:$0xff]
    %v282 = vld [vmem:[#allocation2 + $0x360] sm:$0xff]
    %v283 = vld [vmem:[#allocation2 + $0x368] sm:$0xff]
    %v284 = vld [vmem:[#allocation2 + $0x370] sm:$0xff]
    %v285 = vld [vmem:[#allocation2 + $0x378] sm:$0xff]
    %v286 = vld [vmem:[#allocation2 + $0x380] sm:$0xff]
    %v287 = vld [vmem:[#allocation2 + $0x388] sm:$0xff]
    %v288 = vld [vmem:[#allocation2 + $0x390] sm:$0xff]
    %v289 = vld [vmem:[#allocation2 + $0x398] sm:$0xff]
    %v290 = vld [vmem:[#allocation2 + $0x3a0] sm:$0xff]
    %v291 = vld [vmem:[#allocation2 + $0x3a8] sm:$0xff]
    %v292 = vld [vmem:[#allocation2 + $0x3b0] sm:$0xff]
    %v293 = vld [vmem:[#allocation2 + $0x3b8] sm:$0xff]
    %v294 = vld [vmem:[#allocation2 + $0x3c0] sm:$0xff]
    %v295 = vld [vmem:[#allocation2 + $0x3c8] sm:$0xff]
    %v296 = vld [vmem:[#allocation2 + $0x3d0] sm:$0xff]
    %v297 = vld [vmem:[#allocation2 + $0x3d8] sm:$0xff]
    %v298 = vld [vmem:[#allocation2 + $0x3e0] sm:$0xff]
    %v299 = vld [vmem:[#allocation2 + $0x3e8] sm:$0xff]
    %v300 = vld [vmem:[#allocation2 + $0x3f0] sm:$0xff]
    %v301 = vld [vmem:[#allocation2 + $0x3f8] sm:$0xff]
    %v302 = vld [vmem:[%s4] sm:$0xf]
    %v304 = vperm.slane %v302, 0
    %v305 = vperm.slane %v302, 1
    %v306 = vperm.slane %v302, 2
    %v307 = vperm.slane %v302, 3
    %v440 = vunpack.c.l.b16 %v174
    %v441 = vunpack.c.h.b16 %v174
    %v442 = vunpack.c.l.b16 %v175
    %v443 = vunpack.c.h.b16 %v175
    %v444 = vunpack.c.l.b16 %v176
    %v445 = vunpack.c.h.b16 %v176
    %v446 = vunpack.c.l.b16 %v177
    %v447 = vunpack.c.h.b16 %v177
    %v448 = vunpack.c.l.b16 %v178
    %v449 = vunpack.c.h.b16 %v178
    %v450 = vunpack.c.l.b16 %v179
    %v451 = vunpack.c.h.b16 %v179
    %v452 = vunpack.c.l.b16 %v180
    %v453 = vunpack.c.h.b16 %v180
    %v454 = vunpack.c.l.b16 %v181
    %v455 = vunpack.c.h.b16 %v181
    %v456 = vunpack.c.l.b16 %v182
    %v457 = vunpack.c.h.b16 %v182
    %v458 = vunpack.c.l.b16 %v183
    %v459 = vunpack.c.h.b16 %v183
    %v460 = vunpack.c.l.b16 %v184
    %v461 = vunpack.c.h.b16 %v184
    %v462 = vunpack.c.l.b16 %v185
    %v463 = vunpack.c.h.b16 %v185
    %v464 = vunpack.c.l.b16 %v186
    %v465 = vunpack.c.h.b16 %v186
    %v466 = vunpack.c.l.b16 %v187
    %v467 = vunpack.c.h.b16 %v187
    %v468 = vunpack.c.l.b16 %v188
    %v469 = vunpack.c.h.b16 %v188
    %v470 = vunpack.c.l.b16 %v189
    %v471 = vunpack.c.h.b16 %v189
    %v472 = vunpack.c.l.b16 %v190
    %v473 = vunpack.c.h.b16 %v190
    %v474 = vunpack.c.l.b16 %v191
    %v475 = vunpack.c.h.b16 %v191
    %v476 = vunpack.c.l.b16 %v192
    %v477 = vunpack.c.h.b16 %v192
    %v478 = vunpack.c.l.b16 %v193
    %v479 = vunpack.c.h.b16 %v193
    %v480 = vunpack.c.l.b16 %v194
    %v481 = vunpack.c.h.b16 %v194
    %v482 = vunpack.c.l.b16 %v195
    %v483 = vunpack.c.h.b16 %v195
    %v484 = vunpack.c.l.b16 %v196
    %v485 = vunpack.c.h.b16 %v196
    %v486 = vunpack.c.l.b16 %v197
    %v487 = vunpack.c.h.b16 %v197
    %v488 = vunpack.c.l.b16 %v198
    %v489 = vunpack.c.h.b16 %v198
    %v490 = vunpack.c.l.b16 %v199
    %v491 = vunpack.c.h.b16 %v199
    %v492 = vunpack.c.l.b16 %v200
    %v493 = vunpack.c.h.b16 %v200
    %v494 = vunpack.c.l.b16 %v201
    %v495 = vunpack.c.h.b16 %v201
    %v496 = vunpack.c.l.b16 %v202
    %v497 = vunpack.c.h.b16 %v202
    %v498 = vunpack.c.l.b16 %v203
    %v499 = vunpack.c.h.b16 %v203
    %v500 = vunpack.c.l.b16 %v204
    %v501 = vunpack.c.h.b16 %v204
    %v502 = vunpack.c.l.b16 %v205
    %v503 = vunpack.c.h.b16 %v205
    %v504 = vunpack.c.l.b16 %v206
    %v505 = vunpack.c.h.b16 %v206
    %v506 = vunpack.c.l.b16 %v207
    %v507 = vunpack.c.h.b16 %v207
    %v508 = vunpack.c.l.b16 %v208
    %v509 = vunpack.c.h.b16 %v208
    %v510 = vunpack.c.l.b16 %v209
    %v511 = vunpack.c.h.b16 %v209
    %v512 = vunpack.c.l.b16 %v210
    %v513 = vunpack.c.h.b16 %v210
    %v514 = vunpack.c.l.b16 %v211
    %v515 = vunpack.c.h.b16 %v211
    %v516 = vunpack.c.l.b16 %v212
    %v517 = vunpack.c.h.b16 %v212
    %v518 = vunpack.c.l.b16 %v213
    %v519 = vunpack.c.h.b16 %v213
    %v520 = vunpack.c.l.b16 %v214
    %v521 = vunpack.c.h.b16 %v214
    %v522 = vunpack.c.l.b16 %v215
    %v523 = vunpack.c.h.b16 %v215
    %v524 = vunpack.c.l.b16 %v216
    %v525 = vunpack.c.h.b16 %v216
    %v526 = vunpack.c.l.b16 %v217
    %v527 = vunpack.c.h.b16 %v217
    %v528 = vunpack.c.l.b16 %v218
    %v529 = vunpack.c.h.b16 %v218
    %v530 = vunpack.c.l.b16 %v219
    %v531 = vunpack.c.h.b16 %v219
    %v532 = vunpack.c.l.b16 %v220
    %v533 = vunpack.c.h.b16 %v220
    %v534 = vunpack.c.l.b16 %v221
    %v535 = vunpack.c.h.b16 %v221
    %v536 = vunpack.c.l.b16 %v222
    %v537 = vunpack.c.h.b16 %v222
    %v538 = vunpack.c.l.b16 %v223
    %v539 = vunpack.c.h.b16 %v223
    %v540 = vunpack.c.l.b16 %v224
    %v541 = vunpack.c.h.b16 %v224
    %v542 = vunpack.c.l.b16 %v225
    %v543 = vunpack.c.h.b16 %v225
    %v544 = vunpack.c.l.b16 %v226
    %v545 = vunpack.c.h.b16 %v226
    %v546 = vunpack.c.l.b16 %v227
    %v547 = vunpack.c.h.b16 %v227
    %v548 = vunpack.c.l.b16 %v228
    %v549 = vunpack.c.h.b16 %v228
    %v550 = vunpack.c.l.b16 %v229
    %v551 = vunpack.c.h.b16 %v229
    %v552 = vunpack.c.l.b16 %v230
    %v553 = vunpack.c.h.b16 %v230
    %v554 = vunpack.c.l.b16 %v231
    %v555 = vunpack.c.h.b16 %v231
    %v556 = vunpack.c.l.b16 %v232
    %v557 = vunpack.c.h.b16 %v232
    %v558 = vunpack.c.l.b16 %v233
    %v559 = vunpack.c.h.b16 %v233
    %v560 = vunpack.c.l.b16 %v234
    %v561 = vunpack.c.h.b16 %v234
    %v562 = vunpack.c.l.b16 %v235
    %v563 = vunpack.c.h.b16 %v235
    %v564 = vunpack.c.l.b16 %v236
    %v565 = vunpack.c.h.b16 %v236
    %v566 = vunpack.c.l.b16 %v237
    %v567 = vunpack.c.h.b16 %v237
    %v568 = vunpack.c.l.b16 %v238
    %v569 = vunpack.c.h.b16 %v238
    %v570 = vunpack.c.l.b16 %v239
    %v571 = vunpack.c.h.b16 %v239
    %v572 = vunpack.c.l.b16 %v240
    %v573 = vunpack.c.h.b16 %v240
    %v574 = vunpack.c.l.b16 %v241
    %v575 = vunpack.c.h.b16 %v241
    %v576 = vunpack.c.l.b16 %v242
    %v577 = vunpack.c.h.b16 %v242
    %v578 = vunpack.c.l.b16 %v243
    %v579 = vunpack.c.h.b16 %v243
    %v580 = vunpack.c.l.b16 %v244
    %v581 = vunpack.c.h.b16 %v244
    %v582 = vunpack.c.l.b16 %v245
    %v583 = vunpack.c.h.b16 %v245
    %v584 = vunpack.c.l.b16 %v246
    %v585 = vunpack.c.h.b16 %v246
    %v586 = vunpack.c.l.b16 %v247
    %v587 = vunpack.c.h.b16 %v247
    %v588 = vunpack.c.l.b16 %v248
    %v589 = vunpack.c.h.b16 %v248
    %v590 = vunpack.c.l.b16 %v249
    %v591 = vunpack.c.h.b16 %v249
    %v592 = vunpack.c.l.b16 %v250
    %v593 = vunpack.c.h.b16 %v250
    %v594 = vunpack.c.l.b16 %v251
    %v595 = vunpack.c.h.b16 %v251
    %v596 = vunpack.c.l.b16 %v252
    %v597 = vunpack.c.h.b16 %v252
    %v598 = vunpack.c.l.b16 %v253
    %v599 = vunpack.c.h.b16 %v253
    %v600 = vunpack.c.l.b16 %v254
    %v601 = vunpack.c.h.b16 %v254
    %v602 = vunpack.c.l.b16 %v255
    %v603 = vunpack.c.h.b16 %v255
    %v604 = vunpack.c.l.b16 %v256
    %v605 = vunpack.c.h.b16 %v256
    %v606 = vunpack.c.l.b16 %v257
    %v607 = vunpack.c.h.b16 %v257
    %v608 = vunpack.c.l.b16 %v258
    %v609 = vunpack.c.h.b16 %v258
    %v610 = vunpack.c.l.b16 %v259
    %v611 = vunpack.c.h.b16 %v259
    %v612 = vunpack.c.l.b16 %v260
    %v613 = vunpack.c.h.b16 %v260
    %v614 = vunpack.c.l.b16 %v261
    %v615 = vunpack.c.h.b16 %v261
    %v616 = vunpack.c.l.b16 %v262
    %v617 = vunpack.c.h.b16 %v262
    %v618 = vunpack.c.l.b16 %v263
    %v619 = vunpack.c.h.b16 %v263
    %v620 = vunpack.c.l.b16 %v264
    %v621 = vunpack.c.h.b16 %v264
    %v622 = vunpack.c.l.b16 %v265
    %v623 = vunpack.c.h.b16 %v265
    %v624 = vunpack.c.l.b16 %v266
    %v625 = vunpack.c.h.b16 %v266
    %v626 = vunpack.c.l.b16 %v267
    %v627 = vunpack.c.h.b16 %v267
    %v628 = vunpack.c.l.b16 %v268
    %v629 = vunpack.c.h.b16 %v268
    %v630 = vunpack.c.l.b16 %v269
    %v631 = vunpack.c.h.b16 %v269
    %v632 = vunpack.c.l.b16 %v270
    %v633 = vunpack.c.h.b16 %v270
    %v634 = vunpack.c.l.b16 %v271
    %v635 = vunpack.c.h.b16 %v271
    %v636 = vunpack.c.l.b16 %v272
    %v637 = vunpack.c.h.b16 %v272
    %v638 = vunpack.c.l.b16 %v273
    %v639 = vunpack.c.h.b16 %v273
    %v640 = vunpack.c.l.b16 %v274
    %v641 = vunpack.c.h.b16 %v274
    %v642 = vunpack.c.l.b16 %v275
    %v643 = vunpack.c.h.b16 %v275
    %v644 = vunpack.c.l.b16 %v276
    %v645 = vunpack.c.h.b16 %v276
    %v646 = vunpack.c.l.b16 %v277
    %v647 = vunpack.c.h.b16 %v277
    %v648 = vunpack.c.l.b16 %v278
    %v649 = vunpack.c.h.b16 %v278
    %v650 = vunpack.c.l.b16 %v279
    %v651 = vunpack.c.h.b16 %v279
    %v652 = vunpack.c.l.b16 %v280
    %v653 = vunpack.c.h.b16 %v280
    %v654 = vunpack.c.l.b16 %v281
    %v655 = vunpack.c.h.b16 %v281
    %v656 = vunpack.c.l.b16 %v282
    %v657 = vunpack.c.h.b16 %v282
    %v658 = vunpack.c.l.b16 %v283
    %v659 = vunpack.c.h.b16 %v283
    %v660 = vunpack.c.l.b16 %v284
    %v661 = vunpack.c.h.b16 %v284
    %v662 = vunpack.c.l.b16 %v285
    %v663 = vunpack.c.h.b16 %v285
    %v664 = vunpack.c.l.b16 %v286
    %v665 = vunpack.c.h.b16 %v286
    %v666 = vunpack.c.l.b16 %v287
    %v667 = vunpack.c.h.b16 %v287
    %v668 = vunpack.c.l.b16 %v288
    %v669 = vunpack.c.h.b16 %v288
    %v670 = vunpack.c.l.b16 %v289
    %v671 = vunpack.c.h.b16 %v289
    %v672 = vunpack.c.l.b16 %v290
    %v673 = vunpack.c.h.b16 %v290
    %v674 = vunpack.c.l.b16 %v291
    %v675 = vunpack.c.h.b16 %v291
    %v676 = vunpack.c.l.b16 %v292
    %v677 = vunpack.c.h.b16 %v292
    %v678 = vunpack.c.l.b16 %v293
    %v679 = vunpack.c.h.b16 %v293
    %v680 = vunpack.c.l.b16 %v294
    %v681 = vunpack.c.h.b16 %v294
    %v682 = vunpack.c.l.b16 %v295
    %v683 = vunpack.c.h.b16 %v295
    %v684 = vunpack.c.l.b16 %v296
    %v685 = vunpack.c.h.b16 %v296
    %v686 = vunpack.c.l.b16 %v297
    %v687 = vunpack.c.h.b16 %v297
    %v688 = vunpack.c.l.b16 %v298
    %v689 = vunpack.c.h.b16 %v298
    %v690 = vunpack.c.l.b16 %v299
    %v691 = vunpack.c.h.b16 %v299
    %v692 = vunpack.c.l.b16 %v300
    %v693 = vunpack.c.h.b16 %v300
    %v694 = vunpack.c.l.b16 %v301
    %v695 = vunpack.c.h.b16 %v301
    %v696 = vpack.c.b16 %v444, %v440
    %v697 = vpack.c.b16 %v445, %v441
    %v698 = vpack.c.b16 %v446, %v442
    %v699 = vpack.c.b16 %v447, %v443
    %v700 = vpack.c.b16 %v452, %v448
    %v701 = vpack.c.b16 %v453, %v449
    %v702 = vpack.c.b16 %v454, %v450
    %v703 = vpack.c.b16 %v455, %v451
    %v704 = vpack.c.b16 %v460, %v456
    %v705 = vpack.c.b16 %v461, %v457
    %v706 = vpack.c.b16 %v462, %v458
    %v707 = vpack.c.b16 %v463, %v459
    %v708 = vpack.c.b16 %v468, %v464
    %v709 = vpack.c.b16 %v469, %v465
    %v710 = vpack.c.b16 %v470, %v466
    %v711 = vpack.c.b16 %v471, %v467
    %v712 = vpack.c.b16 %v476, %v472
    %v713 = vpack.c.b16 %v477, %v473
    %v714 = vpack.c.b16 %v478, %v474
    %v715 = vpack.c.b16 %v479, %v475
    %v716 = vpack.c.b16 %v484, %v480
    %v717 = vpack.c.b16 %v485, %v481
    %v718 = vpack.c.b16 %v486, %v482
    %v719 = vpack.c.b16 %v487, %v483
    %v720 = vpack.c.b16 %v492, %v488
    %v721 = vpack.c.b16 %v493, %v489
    %v722 = vpack.c.b16 %v494, %v490
    %v723 = vpack.c.b16 %v495, %v491
    %v724 = vpack.c.b16 %v500, %v496
    %v725 = vpack.c.b16 %v501, %v497
    %v726 = vpack.c.b16 %v502, %v498
    %v727 = vpack.c.b16 %v503, %v499
    %v728 = vpack.c.b16 %v508, %v504
    %v729 = vpack.c.b16 %v509, %v505
    %v730 = vpack.c.b16 %v510, %v506
    %v731 = vpack.c.b16 %v511, %v507
    %v732 = vpack.c.b16 %v516, %v512
    %v733 = vpack.c.b16 %v517, %v513
    %v734 = vpack.c.b16 %v518, %v514
    %v735 = vpack.c.b16 %v519, %v515
    %v736 = vpack.c.b16 %v524, %v520
    %v737 = vpack.c.b16 %v525, %v521
    %v738 = vpack.c.b16 %v526, %v522
    %v739 = vpack.c.b16 %v527, %v523
    %v740 = vpack.c.b16 %v532, %v528
    %v741 = vpack.c.b16 %v533, %v529
    %v742 = vpack.c.b16 %v534, %v530
    %v743 = vpack.c.b16 %v535, %v531
    %v744 = vpack.c.b16 %v540, %v536
    %v745 = vpack.c.b16 %v541, %v537
    %v746 = vpack.c.b16 %v542, %v538
    %v747 = vpack.c.b16 %v543, %v539
    %v748 = vpack.c.b16 %v548, %v544
    %v749 = vpack.c.b16 %v549, %v545
    %v750 = vpack.c.b16 %v550, %v546
    %v751 = vpack.c.b16 %v551, %v547
    %v752 = vpack.c.b16 %v556, %v552
    %v753 = vpack.c.b16 %v557, %v553
    %v754 = vpack.c.b16 %v558, %v554
    %v755 = vpack.c.b16 %v559, %v555
    %v756 = vpack.c.b16 %v564, %v560
    %v757 = vpack.c.b16 %v565, %v561
    %v758 = vpack.c.b16 %v566, %v562
    %v759 = vpack.c.b16 %v567, %v563
    %v760 = vpack.c.b16 %v572, %v568
    %v761 = vpack.c.b16 %v573, %v569
    %v762 = vpack.c.b16 %v574, %v570
    %v763 = vpack.c.b16 %v575, %v571
    %v764 = vpack.c.b16 %v580, %v576
    %v765 = vpack.c.b16 %v581, %v577
    %v766 = vpack.c.b16 %v582, %v578
    %v767 = vpack.c.b16 %v583, %v579
    %v768 = vpack.c.b16 %v588, %v584
    %v769 = vpack.c.b16 %v589, %v585
    %v770 = vpack.c.b16 %v590, %v586
    %v771 = vpack.c.b16 %v591, %v587
    %v772 = vpack.c.b16 %v596, %v592
    %v773 = vpack.c.b16 %v597, %v593
    %v774 = vpack.c.b16 %v598, %v594
    %v775 = vpack.c.b16 %v599, %v595
    %v776 = vpack.c.b16 %v604, %v600
    %v777 = vpack.c.b16 %v605, %v601
    %v778 = vpack.c.b16 %v606, %v602
    %v779 = vpack.c.b16 %v607, %v603
    %v780 = vpack.c.b16 %v612, %v608
    %v781 = vpack.c.b16 %v613, %v609
    %v782 = vpack.c.b16 %v614, %v610
    %v783 = vpack.c.b16 %v615, %v611
    %v784 = vpack.c.b16 %v620, %v616
    %v785 = vpack.c.b16 %v621, %v617
    %v786 = vpack.c.b16 %v622, %v618
    %v787 = vpack.c.b16 %v623, %v619
    %v788 = vpack.c.b16 %v628, %v624
    %v789 = vpack.c.b16 %v629, %v625
    %v790 = vpack.c.b16 %v630, %v626
    %v791 = vpack.c.b16 %v631, %v627
    %v792 = vpack.c.b16 %v636, %v632
    %v793 = vpack.c.b16 %v637, %v633
    %v794 = vpack.c.b16 %v638, %v634
    %v795 = vpack.c.b16 %v639, %v635
    %v796 = vpack.c.b16 %v644, %v640
    %v797 = vpack.c.b16 %v645, %v641
    %v798 = vpack.c.b16 %v646, %v642
    %v799 = vpack.c.b16 %v647, %v643
    %v800 = vpack.c.b16 %v652, %v648
    %v801 = vpack.c.b16 %v653, %v649
    %v802 = vpack.c.b16 %v654, %v650
    %v803 = vpack.c.b16 %v655, %v651
    %v804 = vpack.c.b16 %v660, %v656
    %v805 = vpack.c.b16 %v661, %v657
    %v806 = vpack.c.b16 %v662, %v658
    %v807 = vpack.c.b16 %v663, %v659
    %v808 = vpack.c.b16 %v668, %v664
    %v809 = vpack.c.b16 %v669, %v665
    %v810 = vpack.c.b16 %v670, %v666
    %v811 = vpack.c.b16 %v671, %v667
    %v812 = vpack.c.b16 %v676, %v672
    %v813 = vpack.c.b16 %v677, %v673
    %v814 = vpack.c.b16 %v678, %v674
    %v815 = vpack.c.b16 %v679, %v675
    %v816 = vpack.c.b16 %v684, %v680
    %v817 = vpack.c.b16 %v685, %v681
    %v818 = vpack.c.b16 %v686, %v682
    %v819 = vpack.c.b16 %v687, %v683
    %v820 = vpack.c.b16 %v692, %v688
    %v821 = vpack.c.b16 %v693, %v689
    %v822 = vpack.c.b16 %v694, %v690
    %v823 = vpack.c.b16 %v695, %v691
    %952 = vmatpush.bf16.msra.mxu0 %v724
    %953 = vmatpush.bf16.msra.mxu0 %v720
    %954 = vmatpush.bf16.msra.mxu0 %v716
    %955 = vmatpush.bf16.msra.mxu0 %v712
    %956 = vmatpush.bf16.msra.mxu0 %v708
    %957 = vmatpush.bf16.msra.mxu0 %v704
    %958 = vmatpush.bf16.msra.mxu0 %v700
    %959 = vmatpush.bf16.msra.mxu0 %v696
    %960 = vmatmul.bf16.gmra.mxu0 %v170
    %v961 = vpop.f32.mrf.mxu0
    %v962 = vadd.f32 %v304, %v961
    %v963 = vpop.f32.mrf.mxu0
    %v964 = vadd.f32 %v304, %v963
    %965 = vdwg.mxu0
    %966 = vmatpush.bf16.msra.mxu0 %v756
    %967 = vmatpush.bf16.msra.mxu0 %v752
    %968 = vmatpush.bf16.msra.mxu0 %v748
    %969 = vmatpush.bf16.msra.mxu0 %v744
    %970 = vmatpush.bf16.msra.mxu0 %v740
    %971 = vmatpush.bf16.msra.mxu0 %v736
    %972 = vmatpush.bf16.msra.mxu0 %v732
    %973 = vmatpush.bf16.msra.mxu0 %v728
    %974 = vmatmul.bf16.gmra.mxu0 %v171
    %v975 = vpop.f32.mrf.mxu0
    %v976 = vadd.f32 %v962, %v975
    %v977 = vpop.f32.mrf.mxu0
    %v978 = vadd.f32 %v964, %v977
    %979 = vdwg.mxu0
    %980 = vmatpush.bf16.msra.mxu0 %v788
    %981 = vmatpush.bf16.msra.mxu0 %v784
    %982 = vmatpush.bf16.msra.mxu0 %v780
    %983 = vmatpush.bf16.msra.mxu0 %v776
    %984 = vmatpush.bf16.msra.mxu0 %v772
    %985 = vmatpush.bf16.msra.mxu0 %v768
    %986 = vmatpush.bf16.msra.mxu0 %v764
    %987 = vmatpush.bf16.msra.mxu0 %v760
    %988 = vmatmul.bf16.gmra.mxu0 %v172
    %v989 = vpop.f32.mrf.mxu0
    %v990 = vadd.f32 %v976, %v989
    %v991 = vpop.f32.mrf.mxu0
    %v992 = vadd.f32 %v978, %v991
    %993 = vdwg.mxu0
    %994 = vmatpush.bf16.msra.mxu0 %v820
    %995 = vmatpush.bf16.msra.mxu0 %v816
    %996 = vmatpush.bf16.msra.mxu0 %v812
    %997 = vmatpush.bf16.msra.mxu0 %v808
    %998 = vmatpush.bf16.msra.mxu0 %v804
    %999 = vmatpush.bf16.msra.mxu0 %v800
    %1000 = vmatpush.bf16.msra.mxu0 %v796
    %1001 = vmatpush.bf16.msra.mxu0 %v792
    %1002 = vmatmul.bf16.gmra.mxu0 %v173
    %v1003 = vpop.f32.mrf.mxu0
    %v1004 = vadd.f32 %v990, %v1003
    %v1005 = vpop.f32.mrf.mxu0
    %v1006 = vadd.f32 %v992, %v1005
    %1007 = vdwg.mxu0
    %1008 = vmatpush.bf16.msra.mxu0 %v725
    %1009 = vmatpush.bf16.msra.mxu0 %v721
    %1010 = vmatpush.bf16.msra.mxu0 %v717
    %1011 = vmatpush.bf16.msra.mxu0 %v713
    %1012 = vmatpush.bf16.msra.mxu0 %v709
    %1013 = vmatpush.bf16.msra.mxu0 %v705
    %1014 = vmatpush.bf16.msra.mxu0 %v701
    %1015 = vmatpush.bf16.msra.mxu0 %v697
    %1016 = vmatmul.bf16.gmra.mxu0 %v170
    %v1017 = vpop.f32.mrf.mxu0
    %v1018 = vadd.f32 %v305, %v1017
    %v1019 = vpop.f32.mrf.mxu0
    %v1020 = vadd.f32 %v305, %v1019
    %1021 = vdwg.mxu0
    %1022 = vmatpush.bf16.msra.mxu0 %v757
    %1023 = vmatpush.bf16.msra.mxu0 %v753
    %1024 = vmatpush.bf16.msra.mxu0 %v749
    %1025 = vmatpush.bf16.msra.mxu0 %v745
    %1026 = vmatpush.bf16.msra.mxu0 %v741
    %1027 = vmatpush.bf16.msra.mxu0 %v737
    %1028 = vmatpush.bf16.msra.mxu0 %v733
    %1029 = vmatpush.bf16.msra.mxu0 %v729
    %1030 = vmatmul.bf16.gmra.mxu0 %v171
    %v1031 = vpop.f32.mrf.mxu0
    %v1032 = vadd.f32 %v1018, %v1031
    %v1033 = vpop.f32.mrf.mxu0
    %v1034 = vadd.f32 %v1020, %v1033
    %1035 = vdwg.mxu0
    %1036 = vmatpush.bf16.msra.mxu0 %v789
    %1037 = vmatpush.bf16.msra.mxu0 %v785
    %1038 = vmatpush.bf16.msra.mxu0 %v781
    %1039 = vmatpush.bf16.msra.mxu0 %v777
    %1040 = vmatpush.bf16.msra.mxu0 %v773
    %1041 = vmatpush.bf16.msra.mxu0 %v769
    %1042 = vmatpush.bf16.msra.mxu0 %v765
    %1043 = vmatpush.bf16.msra.mxu0 %v761
    %1044 = vmatmul.bf16.gmra.mxu0 %v172
    %v1045 = vpop.f32.mrf.mxu0
    %v1046 = vadd.f32 %v1032, %v1045
    %v1047 = vpop.f32.mrf.mxu0
    %v1048 = vadd.f32 %v1034, %v1047
    %1049 = vdwg.mxu0
    %1050 = vmatpush.bf16.msra.mxu0 %v821
    %1051 = vmatpush.bf16.msra.mxu0 %v817
    %1052 = vmatpush.bf16.msra.mxu0 %v813
    %1053 = vmatpush.bf16.msra.mxu0 %v809
    %1054 = vmatpush.bf16.msra.mxu0 %v805
    %1055 = vmatpush.bf16.msra.mxu0 %v801
    %1056 = vmatpush.bf16.msra.mxu0 %v797
    %1057 = vmatpush.bf16.msra.mxu0 %v793
    %1058 = vmatmul.bf16.gmra.mxu0 %v173
    %v1059 = vpop.f32.mrf.mxu0
    %v1060 = vadd.f32 %v1046, %v1059
    %v1061 = vpop.f32.mrf.mxu0
    %v1062 = vadd.f32 %v1048, %v1061
    %1063 = vdwg.mxu0
    %1064 = vmatpush.bf16.msra.mxu0 %v726
    %1065 = vmatpush.bf16.msra.mxu0 %v722
    %1066 = vmatpush.bf16.msra.mxu0 %v718
    %1067 = vmatpush.bf16.msra.mxu0 %v714
    %1068 = vmatpush.bf16.msra.mxu0 %v710
    %1069 = vmatpush.bf16.msra.mxu0 %v706
    %1070 = vmatpush.bf16.msra.mxu0 %v702
    %1071 = vmatpush.bf16.msra.mxu0 %v698
    %1072 = vmatmul.bf16.gmra.mxu0 %v170
    %v1073 = vpop.f32.mrf.mxu0
    %v1074 = vadd.f32 %v306, %v1073
    %v1075 = vpop.f32.mrf.mxu0
    %v1076 = vadd.f32 %v306, %v1075
    %1077 = vdwg.mxu0
    %1078 = vmatpush.bf16.msra.mxu0 %v758
    %1079 = vmatpush.bf16.msra.mxu0 %v754
    %1080 = vmatpush.bf16.msra.mxu0 %v750
    %1081 = vmatpush.bf16.msra.mxu0 %v746
    %1082 = vmatpush.bf16.msra.mxu0 %v742
    %1083 = vmatpush.bf16.msra.mxu0 %v738
    %1084 = vmatpush.bf16.msra.mxu0 %v734
    %1085 = vmatpush.bf16.msra.mxu0 %v730
    %1086 = vmatmul.bf16.gmra.mxu0 %v171
    %v1087 = vpop.f32.mrf.mxu0
    %v1088 = vadd.f32 %v1074, %v1087
    %v1089 = vpop.f32.mrf.mxu0
    %v1090 = vadd.f32 %v1076, %v1089
    %1091 = vdwg.mxu0
    %1092 = vmatpush.bf16.msra.mxu0 %v790
    %1093 = vmatpush.bf16.msra.mxu0 %v786
    %1094 = vmatpush.bf16.msra.mxu0 %v782
    %1095 = vmatpush.bf16.msra.mxu0 %v778
    %1096 = vmatpush.bf16.msra.mxu0 %v774
    %1097 = vmatpush.bf16.msra.mxu0 %v770
    %1098 = vmatpush.bf16.msra.mxu0 %v766
    %1099 = vmatpush.bf16.msra.mxu0 %v762
    %1100 = vmatmul.bf16.gmra.mxu0 %v172
    %v1101 = vpop.f32.mrf.mxu0
    %v1102 = vadd.f32 %v1088, %v1101
    %v1103 = vpop.f32.mrf.mxu0
    %v1104 = vadd.f32 %v1090, %v1103
    %1105 = vdwg.mxu0
    %1106 = vmatpush.bf16.msra.mxu0 %v822
    %1107 = vmatpush.bf16.msra.mxu0 %v818
    %1108 = vmatpush.bf16.msra.mxu0 %v814
    %1109 = vmatpush.bf16.msra.mxu0 %v810
    %1110 = vmatpush.bf16.msra.mxu0 %v806
    %1111 = vmatpush.bf16.msra.mxu0 %v802
    %1112 = vmatpush.bf16.msra.mxu0 %v798
    %1113 = vmatpush.bf16.msra.mxu0 %v794
    %1114 = vmatmul.bf16.gmra.mxu0 %v173
    %v1115 = vpop.f32.mrf.mxu0
    %v1116 = vadd.f32 %v1102, %v1115
    %v1117 = vpop.f32.mrf.mxu0
    %v1118 = vadd.f32 %v1104, %v1117
    %1119 = vdwg.mxu0
    %1120 = vmatpush.bf16.msra.mxu0 %v727
    %1121 = vmatpush.bf16.msra.mxu0 %v723
    %1122 = vmatpush.bf16.msra.mxu0 %v719
    %1123 = vmatpush.bf16.msra.mxu0 %v715
    %1124 = vmatpush.bf16.msra.mxu0 %v711
    %1125 = vmatpush.bf16.msra.mxu0 %v707
    %1126 = vmatpush.bf16.msra.mxu0 %v703
    %1127 = vmatpush.bf16.msra.mxu0 %v699
    %1128 = vmatmul.bf16.gmra.mxu0 %v170
    %v1129 = vpop.f32.mrf.mxu0
    %v1130 = vadd.f32 %v307, %v1129
    %v1131 = vpop.f32.mrf.mxu0
    %v1132 = vadd.f32 %v307, %v1131
    %1133 = vdwg.mxu0
    %1134 = vmatpush.bf16.msra.mxu0 %v759
    %1135 = vmatpush.bf16.msra.mxu0 %v755
    %1136 = vmatpush.bf16.msra.mxu0 %v751
    %1137 = vmatpush.bf16.msra.mxu0 %v747
    %1138 = vmatpush.bf16.msra.mxu0 %v743
    %1139 = vmatpush.bf16.msra.mxu0 %v739
    %1140 = vmatpush.bf16.msra.mxu0 %v735
    %1141 = vmatpush.bf16.msra.mxu0 %v731
    %1142 = vmatmul.bf16.gmra.mxu0 %v171
    %v1143 = vpop.f32.mrf.mxu0
    %v1144 = vadd.f32 %v1130, %v1143
    %v1145 = vpop.f32.mrf.mxu0
    %v1146 = vadd.f32 %v1132, %v1145
    %1147 = vdwg.mxu0
    %1148 = vmatpush.bf16.msra.mxu0 %v791
    %1149 = vmatpush.bf16.msra.mxu0 %v787
    %1150 = vmatpush.bf16.msra.mxu0 %v783
    %1151 = vmatpush.bf16.msra.mxu0 %v779
    %1152 = vmatpush.bf16.msra.mxu0 %v775
    %1153 = vmatpush.bf16.msra.mxu0 %v771
    %1154 = vmatpush.bf16.msra.mxu0 %v767
    %1155 = vmatpush.bf16.msra.mxu0 %v763
    %1156 = vmatmul.bf16.gmra.mxu0 %v172
    %v1157 = vpop.f32.mrf.mxu0
    %v1158 = vadd.f32 %v1144, %v1157
    %v1159 = vpop.f32.mrf.mxu0
    %v1160 = vadd.f32 %v1146, %v1159
    %1161 = vdwg.mxu0
    %1162 = vmatpush.bf16.msra.mxu0 %v823
    %1163 = vmatpush.bf16.msra.mxu0 %v819
    %1164 = vmatpush.bf16.msra.mxu0 %v815
    %1165 = vmatpush.bf16.msra.mxu0 %v811
    %1166 = vmatpush.bf16.msra.mxu0 %v807
    %1167 = vmatpush.bf16.msra.mxu0 %v803
    %1168 = vmatpush.bf16.msra.mxu0 %v799
    %1169 = vmatpush.bf16.msra.mxu0 %v795
    %1170 = vmatmul.bf16.gmra.mxu0 %v173
    %v1171 = vpop.f32.mrf.mxu0
    %v1172 = vadd.f32 %v1158, %v1171
    %v1173 = vpop.f32.mrf.mxu0
    %v1174 = vadd.f32 %v1160, %v1173
    %1175 = vdwg.mxu0
    %v1176 = vmax.f32 %v1004, 0.0
    %v1177 = vmax.f32 %v1060, 0.0
    %v1178 = vmax.f32 %v1116, 0.0
    %v1179 = vmax.f32 %v1172, 0.0
    %v1180 = vmax.f32 %v1006, 0.0
    %v1181 = vmax.f32 %v1062, 0.0
    %v1182 = vmax.f32 %v1118, 0.0
    %v1183 = vmax.f32 %v1174, 0.0
    %v1184 = vpack.c.bf16 %v1180, %v1176
    %v1185 = vpack.c.bf16 %v1181, %v1177
    %v1186 = vpack.c.bf16 %v1182, %v1178
    %v1187 = vpack.c.bf16 %v1183, %v1179
    %v1188 = vld [vmem:[#allocation4] sm:$0xff]
    %v1189 = vld [vmem:[#allocation4 + $0x8] sm:$0xff]
    %v1190 = vld [vmem:[#allocation4 + $0x10] sm:$0xff]
    %v1191 = vld [vmem:[#allocation4 + $0x18] sm:$0xff]
    %v1192 = vld [vmem:[#allocation4 + $0x20] sm:$0xff]
    %v1193 = vld [vmem:[#allocation4 + $0x28] sm:$0xff]
    %v1194 = vld [vmem:[#allocation4 + $0x30] sm:$0xff]
    %v1195 = vld [vmem:[#allocation4 + $0x38] sm:$0xff]
    %v1196 = vld [vmem:[#allocation4 + $0x40] sm:$0xff]
    %v1197 = vld [vmem:[#allocation4 + $0x48] sm:$0xff]
    %v1198 = vld [vmem:[#allocation4 + $0x50] sm:$0xff]
    %v1199 = vld [vmem:[#allocation4 + $0x58] sm:$0xff]
    %v1200 = vld [vmem:[#allocation4 + $0x60] sm:$0xff]
    %v1201 = vld [vmem:[#allocation4 + $0x68] sm:$0xff]
    %v1202 = vld [vmem:[#allocation4 + $0x70] sm:$0xff]
    %v1203 = vld [vmem:[#allocation4 + $0x78] sm:$0xff]
    %v1204 = vld [vmem:[#allocation4 + $0x80] sm:$0xff]
    %v1205 = vld [vmem:[#allocation4 + $0x88] sm:$0xff]
    %v1206 = vld [vmem:[#allocation4 + $0x90] sm:$0xff]
    %v1207 = vld [vmem:[#allocation4 + $0x98] sm:$0xff]
    %v1208 = vld [vmem:[#allocation4 + $0xa0] sm:$0xff]
    %v1209 = vld [vmem:[#allocation4 + $0xa8] sm:$0xff]
    %v1210 = vld [vmem:[#allocation4 + $0xb0] sm:$0xff]
    %v1211 = vld [vmem:[#allocation4 + $0xb8] sm:$0xff]
    %v1212 = vld [vmem:[#allocation4 + $0xc0] sm:$0xff]
    %v1213 = vld [vmem:[#allocation4 + $0xc8] sm:$0xff]
    %v1214 = vld [vmem:[#allocation4 + $0xd0] sm:$0xff]
    %v1215 = vld [vmem:[#allocation4 + $0xd8] sm:$0xff]
    %v1216 = vld [vmem:[#allocation4 + $0xe0] sm:$0xff]
    %v1217 = vld [vmem:[#allocation4 + $0xe8] sm:$0xff]
    %v1218 = vld [vmem:[#allocation4 + $0xf0] sm:$0xff]
    %v1219 = vld [vmem:[#allocation4 + $0xf8] sm:$0xff]
    %v1220 = vld [vmem:[#allocation4 + $0x100] sm:$0xff]
    %v1221 = vld [vmem:[#allocation4 + $0x108] sm:$0xff]
    %v1222 = vld [vmem:[#allocation4 + $0x110] sm:$0xff]
    %v1223 = vld [vmem:[#allocation4 + $0x118] sm:$0xff]
    %v1224 = vld [vmem:[#allocation4 + $0x120] sm:$0xff]
    %v1225 = vld [vmem:[#allocation4 + $0x128] sm:$0xff]
    %v1226 = vld [vmem:[#allocation4 + $0x130] sm:$0xff]
    %v1227 = vld [vmem:[#allocation4 + $0x138] sm:$0xff]
    %v1228 = vld [vmem:[#allocation4 + $0x140] sm:$0xff]
    %v1229 = vld [vmem:[#allocation4 + $0x148] sm:$0xff]
    %v1230 = vld [vmem:[#allocation4 + $0x150] sm:$0xff]
    %v1231 = vld [vmem:[#allocation4 + $0x158] sm:$0xff]
    %v1232 = vld [vmem:[#allocation4 + $0x160] sm:$0xff]
    %v1233 = vld [vmem:[#allocation4 + $0x168] sm:$0xff]
    %v1234 = vld [vmem:[#allocation4 + $0x170] sm:$0xff]
    %v1235 = vld [vmem:[#allocation4 + $0x178] sm:$0xff]
    %v1236 = vld [vmem:[#allocation4 + $0x180] sm:$0xff]
    %v1237 = vld [vmem:[#allocation4 + $0x188] sm:$0xff]
    %v1238 = vld [vmem:[#allocation4 + $0x190] sm:$0xff]
    %v1239 = vld [vmem:[#allocation4 + $0x198] sm:$0xff]
    %v1240 = vld [vmem:[#allocation4 + $0x1a0] sm:$0xff]
    %v1241 = vld [vmem:[#allocation4 + $0x1a8] sm:$0xff]
    %v1242 = vld [vmem:[#allocation4 + $0x1b0] sm:$0xff]
    %v1243 = vld [vmem:[#allocation4 + $0x1b8] sm:$0xff]
    %v1244 = vld [vmem:[#allocation4 + $0x1c0] sm:$0xff]
    %v1245 = vld [vmem:[#allocation4 + $0x1c8] sm:$0xff]
    %v1246 = vld [vmem:[#allocation4 + $0x1d0] sm:$0xff]
    %v1247 = vld [vmem:[#allocation4 + $0x1d8] sm:$0xff]
    %v1248 = vld [vmem:[#allocation4 + $0x1e0] sm:$0xff]
    %v1249 = vld [vmem:[#allocation4 + $0x1e8] sm:$0xff]
    %v1250 = vld [vmem:[#allocation4 + $0x1f0] sm:$0xff]
    %v1251 = vld [vmem:[#allocation4 + $0x1f8] sm:$0xff]
    %v1252 = vld [vmem:[#allocation4 + $0x200] sm:$0xff]
    %v1253 = vld [vmem:[#allocation4 + $0x208] sm:$0xff]
    %v1254 = vld [vmem:[#allocation4 + $0x210] sm:$0xff]
    %v1255 = vld [vmem:[#allocation4 + $0x218] sm:$0xff]
    %v1256 = vld [vmem:[#allocation4 + $0x220] sm:$0xff]
    %v1257 = vld [vmem:[#allocation4 + $0x228] sm:$0xff]
    %v1258 = vld [vmem:[#allocation4 + $0x230] sm:$0xff]
    %v1259 = vld [vmem:[#allocation4 + $0x238] sm:$0xff]
    %v1260 = vld [vmem:[#allocation4 + $0x240] sm:$0xff]
    %v1261 = vld [vmem:[#allocation4 + $0x248] sm:$0xff]
    %v1262 = vld [vmem:[#allocation4 + $0x250] sm:$0xff]
    %v1263 = vld [vmem:[#allocation4 + $0x258] sm:$0xff]
    %v1264 = vld [vmem:[#allocation4 + $0x260] sm:$0xff]
    %v1265 = vld [vmem:[#allocation4 + $0x268] sm:$0xff]
    %v1266 = vld [vmem:[#allocation4 + $0x270] sm:$0xff]
    %v1267 = vld [vmem:[#allocation4 + $0x278] sm:$0xff]
    %v1268 = vld [vmem:[#allocation4 + $0x280] sm:$0xff]
    %v1269 = vld [vmem:[#allocation4 + $0x288] sm:$0xff]
    %v1270 = vld [vmem:[#allocation4 + $0x290] sm:$0xff]
    %v1271 = vld [vmem:[#allocation4 + $0x298] sm:$0xff]
    %v1272 = vld [vmem:[#allocation4 + $0x2a0] sm:$0xff]
    %v1273 = vld [vmem:[#allocation4 + $0x2a8] sm:$0xff]
    %v1274 = vld [vmem:[#allocation4 + $0x2b0] sm:$0xff]
    %v1275 = vld [vmem:[#allocation4 + $0x2b8] sm:$0xff]
    %v1276 = vld [vmem:[#allocation4 + $0x2c0] sm:$0xff]
    %v1277 = vld [vmem:[#allocation4 + $0x2c8] sm:$0xff]
    %v1278 = vld [vmem:[#allocation4 + $0x2d0] sm:$0xff]
    %v1279 = vld [vmem:[#allocation4 + $0x2d8] sm:$0xff]
    %v1280 = vld [vmem:[#allocation4 + $0x2e0] sm:$0xff]
    %v1281 = vld [vmem:[#allocation4 + $0x2e8] sm:$0xff]
    %v1282 = vld [vmem:[#allocation4 + $0x2f0] sm:$0xff]
    %v1283 = vld [vmem:[#allocation4 + $0x2f8] sm:$0xff]
    %v1284 = vld [vmem:[#allocation4 + $0x300] sm:$0xff]
    %v1285 = vld [vmem:[#allocation4 + $0x308] sm:$0xff]
    %v1286 = vld [vmem:[#allocation4 + $0x310] sm:$0xff]
    %v1287 = vld [vmem:[#allocation4 + $0x318] sm:$0xff]
    %v1288 = vld [vmem:[#allocation4 + $0x320] sm:$0xff]
    %v1289 = vld [vmem:[#allocation4 + $0x328] sm:$0xff]
    %v1290 = vld [vmem:[#allocation4 + $0x330] sm:$0xff]
    %v1291 = vld [vmem:[#allocation4 + $0x338] sm:$0xff]
    %v1292 = vld [vmem:[#allocation4 + $0x340] sm:$0xff]
    %v1293 = vld [vmem:[#allocation4 + $0x348] sm:$0xff]
    %v1294 = vld [vmem:[#allocation4 + $0x350] sm:$0xff]
    %v1295 = vld [vmem:[#allocation4 + $0x358] sm:$0xff]
    %v1296 = vld [vmem:[#allocation4 + $0x360] sm:$0xff]
    %v1297 = vld [vmem:[#allocation4 + $0x368] sm:$0xff]
    %v1298 = vld [vmem:[#allocation4 + $0x370] sm:$0xff]
    %v1299 = vld [vmem:[#allocation4 + $0x378] sm:$0xff]
    %v1300 = vld [vmem:[#allocation4 + $0x380] sm:$0xff]
    %v1301 = vld [vmem:[#allocation4 + $0x388] sm:$0xff]
    %v1302 = vld [vmem:[#allocation4 + $0x390] sm:$0xff]
    %v1303 = vld [vmem:[#allocation4 + $0x398] sm:$0xff]
    %v1304 = vld [vmem:[#allocation4 + $0x3a0] sm:$0xff]
    %v1305 = vld [vmem:[#allocation4 + $0x3a8] sm:$0xff]
    %v1306 = vld [vmem:[#allocation4 + $0x3b0] sm:$0xff]
    %v1307 = vld [vmem:[#allocation4 + $0x3b8] sm:$0xff]
    %v1308 = vld [vmem:[#allocation4 + $0x3c0] sm:$0xff]
    %v1309 = vld [vmem:[#allocation4 + $0x3c8] sm:$0xff]
    %v1310 = vld [vmem:[#allocation4 + $0x3d0] sm:$0xff]
    %v1311 = vld [vmem:[#allocation4 + $0x3d8] sm:$0xff]
    %v1312 = vld [vmem:[#allocation4 + $0x3e0] sm:$0xff]
    %v1313 = vld [vmem:[#allocation4 + $0x3e8] sm:$0xff]
    %v1314 = vld [vmem:[#allocation4 + $0x3f0] sm:$0xff]
    %v1315 = vld [vmem:[#allocation4 + $0x3f8] sm:$0xff]
    %v1316 = vld [vmem:[%s6] sm:$0xf]
    %v1318 = vperm.slane %v1316, 0
    %v1319 = vperm.slane %v1316, 1
    %v1320 = vperm.slane %v1316, 2
    %v1321 = vperm.slane %v1316, 3
    %v1454 = vunpack.c.l.b16 %v1188
    %v1455 = vunpack.c.h.b16 %v1188
    %v1456 = vunpack.c.l.b16 %v1189
    %v1457 = vunpack.c.h.b16 %v1189
    %v1458 = vunpack.c.l.b16 %v1190
    %v1459 = vunpack.c.h.b16 %v1190
    %v1460 = vunpack.c.l.b16 %v1191
    %v1461 = vunpack.c.h.b16 %v1191
    %v1462 = vunpack.c.l.b16 %v1192
    %v1463 = vunpack.c.h.b16 %v1192
    %v1464 = vunpack.c.l.b16 %v1193
    %v1465 = vunpack.c.h.b16 %v1193
    %v1466 = vunpack.c.l.b16 %v1194
    %v1467 = vunpack.c.h.b16 %v1194
    %v1468 = vunpack.c.l.b16 %v1195
    %v1469 = vunpack.c.h.b16 %v1195
    %v1470 = vunpack.c.l.b16 %v1196
    %v1471 = vunpack.c.h.b16 %v1196
    %v1472 = vunpack.c.l.b16 %v1197
    %v1473 = vunpack.c.h.b16 %v1197
    %v1474 = vunpack.c.l.b16 %v1198
    %v1475 = vunpack.c.h.b16 %v1198
    %v1476 = vunpack.c.l.b16 %v1199
    %v1477 = vunpack.c.h.b16 %v1199
    %v1478 = vunpack.c.l.b16 %v1200
    %v1479 = vunpack.c.h.b16 %v1200
    %v1480 = vunpack.c.l.b16 %v1201
    %v1481 = vunpack.c.h.b16 %v1201
    %v1482 = vunpack.c.l.b16 %v1202
    %v1483 = vunpack.c.h.b16 %v1202
    %v1484 = vunpack.c.l.b16 %v1203
    %v1485 = vunpack.c.h.b16 %v1203
    %v1486 = vunpack.c.l.b16 %v1204
    %v1487 = vunpack.c.h.b16 %v1204
    %v1488 = vunpack.c.l.b16 %v1205
    %v1489 = vunpack.c.h.b16 %v1205
    %v1490 = vunpack.c.l.b16 %v1206
    %v1491 = vunpack.c.h.b16 %v1206
    %v1492 = vunpack.c.l.b16 %v1207
    %v1493 = vunpack.c.h.b16 %v1207
    %v1494 = vunpack.c.l.b16 %v1208
    %v1495 = vunpack.c.h.b16 %v1208
    %v1496 = vunpack.c.l.b16 %v1209
    %v1497 = vunpack.c.h.b16 %v1209
    %v1498 = vunpack.c.l.b16 %v1210
    %v1499 = vunpack.c.h.b16 %v1210
    %v1500 = vunpack.c.l.b16 %v1211
    %v1501 = vunpack.c.h.b16 %v1211
    %v1502 = vunpack.c.l.b16 %v1212
    %v1503 = vunpack.c.h.b16 %v1212
    %v1504 = vunpack.c.l.b16 %v1213
    %v1505 = vunpack.c.h.b16 %v1213
    %v1506 = vunpack.c.l.b16 %v1214
    %v1507 = vunpack.c.h.b16 %v1214
    %v1508 = vunpack.c.l.b16 %v1215
    %v1509 = vunpack.c.h.b16 %v1215
    %v1510 = vunpack.c.l.b16 %v1216
    %v1511 = vunpack.c.h.b16 %v1216
    %v1512 = vunpack.c.l.b16 %v1217
    %v1513 = vunpack.c.h.b16 %v1217
    %v1514 = vunpack.c.l.b16 %v1218
    %v1515 = vunpack.c.h.b16 %v1218
    %v1516 = vunpack.c.l.b16 %v1219
    %v1517 = vunpack.c.h.b16 %v1219
    %v1518 = vunpack.c.l.b16 %v1220
    %v1519 = vunpack.c.h.b16 %v1220
    %v1520 = vunpack.c.l.b16 %v1221
    %v1521 = vunpack.c.h.b16 %v1221
    %v1522 = vunpack.c.l.b16 %v1222
    %v1523 = vunpack.c.h.b16 %v1222
    %v1524 = vunpack.c.l.b16 %v1223
    %v1525 = vunpack.c.h.b16 %v1223
    %v1526 = vunpack.c.l.b16 %v1224
    %v1527 = vunpack.c.h.b16 %v1224
    %v1528 = vunpack.c.l.b16 %v1225
    %v1529 = vunpack.c.h.b16 %v1225
    %v1530 = vunpack.c.l.b16 %v1226
    %v1531 = vunpack.c.h.b16 %v1226
    %v1532 = vunpack.c.l.b16 %v1227
    %v1533 = vunpack.c.h.b16 %v1227
    %v1534 = vunpack.c.l.b16 %v1228
    %v1535 = vunpack.c.h.b16 %v1228
    %v1536 = vunpack.c.l.b16 %v1229
    %v1537 = vunpack.c.h.b16 %v1229
    %v1538 = vunpack.c.l.b16 %v1230
    %v1539 = vunpack.c.h.b16 %v1230
    %v1540 = vunpack.c.l.b16 %v1231
    %v1541 = vunpack.c.h.b16 %v1231
    %v1542 = vunpack.c.l.b16 %v1232
    %v1543 = vunpack.c.h.b16 %v1232
    %v1544 = vunpack.c.l.b16 %v1233
    %v1545 = vunpack.c.h.b16 %v1233
    %v1546 = vunpack.c.l.b16 %v1234
    %v1547 = vunpack.c.h.b16 %v1234
    %v1548 = vunpack.c.l.b16 %v1235
    %v1549 = vunpack.c.h.b16 %v1235
    %v1550 = vunpack.c.l.b16 %v1236
    %v1551 = vunpack.c.h.b16 %v1236
    %v1552 = vunpack.c.l.b16 %v1237
    %v1553 = vunpack.c.h.b16 %v1237
    %v1554 = vunpack.c.l.b16 %v1238
    %v1555 = vunpack.c.h.b16 %v1238
    %v1556 = vunpack.c.l.b16 %v1239
    %v1557 = vunpack.c.h.b16 %v1239
    %v1558 = vunpack.c.l.b16 %v1240
    %v1559 = vunpack.c.h.b16 %v1240
    %v1560 = vunpack.c.l.b16 %v1241
    %v1561 = vunpack.c.h.b16 %v1241
    %v1562 = vunpack.c.l.b16 %v1242
    %v1563 = vunpack.c.h.b16 %v1242
    %v1564 = vunpack.c.l.b16 %v1243
    %v1565 = vunpack.c.h.b16 %v1243
    %v1566 = vunpack.c.l.b16 %v1244
    %v1567 = vunpack.c.h.b16 %v1244
    %v1568 = vunpack.c.l.b16 %v1245
    %v1569 = vunpack.c.h.b16 %v1245
    %v1570 = vunpack.c.l.b16 %v1246
    %v1571 = vunpack.c.h.b16 %v1246
    %v1572 = vunpack.c.l.b16 %v1247
    %v1573 = vunpack.c.h.b16 %v1247
    %v1574 = vunpack.c.l.b16 %v1248
    %v1575 = vunpack.c.h.b16 %v1248
    %v1576 = vunpack.c.l.b16 %v1249
    %v1577 = vunpack.c.h.b16 %v1249
    %v1578 = vunpack.c.l.b16 %v1250
    %v1579 = vunpack.c.h.b16 %v1250
    %v1580 = vunpack.c.l.b16 %v1251
    %v1581 = vunpack.c.h.b16 %v1251
    %v1582 = vunpack.c.l.b16 %v1252
    %v1583 = vunpack.c.h.b16 %v1252
    %v1584 = vunpack.c.l.b16 %v1253
    %v1585 = vunpack.c.h.b16 %v1253
    %v1586 = vunpack.c.l.b16 %v1254
    %v1587 = vunpack.c.h.b16 %v1254
    %v1588 = vunpack.c.l.b16 %v1255
    %v1589 = vunpack.c.h.b16 %v1255
    %v1590 = vunpack.c.l.b16 %v1256
    %v1591 = vunpack.c.h.b16 %v1256
    %v1592 = vunpack.c.l.b16 %v1257
    %v1593 = vunpack.c.h.b16 %v1257
    %v1594 = vunpack.c.l.b16 %v1258
    %v1595 = vunpack.c.h.b16 %v1258
    %v1596 = vunpack.c.l.b16 %v1259
    %v1597 = vunpack.c.h.b16 %v1259
    %v1598 = vunpack.c.l.b16 %v1260
    %v1599 = vunpack.c.h.b16 %v1260
    %v1600 = vunpack.c.l.b16 %v1261
    %v1601 = vunpack.c.h.b16 %v1261
    %v1602 = vunpack.c.l.b16 %v1262
    %v1603 = vunpack.c.h.b16 %v1262
    %v1604 = vunpack.c.l.b16 %v1263
    %v1605 = vunpack.c.h.b16 %v1263
    %v1606 = vunpack.c.l.b16 %v1264
    %v1607 = vunpack.c.h.b16 %v1264
    %v1608 = vunpack.c.l.b16 %v1265
    %v1609 = vunpack.c.h.b16 %v1265
    %v1610 = vunpack.c.l.b16 %v1266
    %v1611 = vunpack.c.h.b16 %v1266
    %v1612 = vunpack.c.l.b16 %v1267
    %v1613 = vunpack.c.h.b16 %v1267
    %v1614 = vunpack.c.l.b16 %v1268
    %v1615 = vunpack.c.h.b16 %v1268
    %v1616 = vunpack.c.l.b16 %v1269
    %v1617 = vunpack.c.h.b16 %v1269
    %v1618 = vunpack.c.l.b16 %v1270
    %v1619 = vunpack.c.h.b16 %v1270
    %v1620 = vunpack.c.l.b16 %v1271
    %v1621 = vunpack.c.h.b16 %v1271
    %v1622 = vunpack.c.l.b16 %v1272
    %v1623 = vunpack.c.h.b16 %v1272
    %v1624 = vunpack.c.l.b16 %v1273
    %v1625 = vunpack.c.h.b16 %v1273
    %v1626 = vunpack.c.l.b16 %v1274
    %v1627 = vunpack.c.h.b16 %v1274
    %v1628 = vunpack.c.l.b16 %v1275
    %v1629 = vunpack.c.h.b16 %v1275
    %v1630 = vunpack.c.l.b16 %v1276
    %v1631 = vunpack.c.h.b16 %v1276
    %v1632 = vunpack.c.l.b16 %v1277
    %v1633 = vunpack.c.h.b16 %v1277
    %v1634 = vunpack.c.l.b16 %v1278
    %v1635 = vunpack.c.h.b16 %v1278
    %v1636 = vunpack.c.l.b16 %v1279
    %v1637 = vunpack.c.h.b16 %v1279
    %v1638 = vunpack.c.l.b16 %v1280
    %v1639 = vunpack.c.h.b16 %v1280
    %v1640 = vunpack.c.l.b16 %v1281
    %v1641 = vunpack.c.h.b16 %v1281
    %v1642 = vunpack.c.l.b16 %v1282
    %v1643 = vunpack.c.h.b16 %v1282
    %v1644 = vunpack.c.l.b16 %v1283
    %v1645 = vunpack.c.h.b16 %v1283
    %v1646 = vunpack.c.l.b16 %v1284
    %v1647 = vunpack.c.h.b16 %v1284
    %v1648 = vunpack.c.l.b16 %v1285
    %v1649 = vunpack.c.h.b16 %v1285
    %v1650 = vunpack.c.l.b16 %v1286
    %v1651 = vunpack.c.h.b16 %v1286
    %v1652 = vunpack.c.l.b16 %v1287
    %v1653 = vunpack.c.h.b16 %v1287
    %v1654 = vunpack.c.l.b16 %v1288
    %v1655 = vunpack.c.h.b16 %v1288
    %v1656 = vunpack.c.l.b16 %v1289
    %v1657 = vunpack.c.h.b16 %v1289
    %v1658 = vunpack.c.l.b16 %v1290
    %v1659 = vunpack.c.h.b16 %v1290
    %v1660 = vunpack.c.l.b16 %v1291
    %v1661 = vunpack.c.h.b16 %v1291
    %v1662 = vunpack.c.l.b16 %v1292
    %v1663 = vunpack.c.h.b16 %v1292
    %v1664 = vunpack.c.l.b16 %v1293
    %v1665 = vunpack.c.h.b16 %v1293
    %v1666 = vunpack.c.l.b16 %v1294
    %v1667 = vunpack.c.h.b16 %v1294
    %v1668 = vunpack.c.l.b16 %v1295
    %v1669 = vunpack.c.h.b16 %v1295
    %v1670 = vunpack.c.l.b16 %v1296
    %v1671 = vunpack.c.h.b16 %v1296
    %v1672 = vunpack.c.l.b16 %v1297
    %v1673 = vunpack.c.h.b16 %v1297
    %v1674 = vunpack.c.l.b16 %v1298
    %v1675 = vunpack.c.h.b16 %v1298
    %v1676 = vunpack.c.l.b16 %v1299
    %v1677 = vunpack.c.h.b16 %v1299
    %v1678 = vunpack.c.l.b16 %v1300
    %v1679 = vunpack.c.h.b16 %v1300
    %v1680 = vunpack.c.l.b16 %v1301
    %v1681 = vunpack.c.h.b16 %v1301
    %v1682 = vunpack.c.l.b16 %v1302
    %v1683 = vunpack.c.h.b16 %v1302
    %v1684 = vunpack.c.l.b16 %v1303
    %v1685 = vunpack.c.h.b16 %v1303
    %v1686 = vunpack.c.l.b16 %v1304
    %v1687 = vunpack.c.h.b16 %v1304
    %v1688 = vunpack.c.l.b16 %v1305
    %v1689 = vunpack.c.h.b16 %v1305
    %v1690 = vunpack.c.l.b16 %v1306
    %v1691 = vunpack.c.h.b16 %v1306
    %v1692 = vunpack.c.l.b16 %v1307
    %v1693 = vunpack.c.h.b16 %v1307
    %v1694 = vunpack.c.l.b16 %v1308
    %v1695 = vunpack.c.h.b16 %v1308
    %v1696 = vunpack.c.l.b16 %v1309
    %v1697 = vunpack.c.h.b16 %v1309
    %v1698 = vunpack.c.l.b16 %v1310
    %v1699 = vunpack.c.h.b16 %v1310
    %v1700 = vunpack.c.l.b16 %v1311
    %v1701 = vunpack.c.h.b16 %v1311
    %v1702 = vunpack.c.l.b16 %v1312
    %v1703 = vunpack.c.h.b16 %v1312
    %v1704 = vunpack.c.l.b16 %v1313
    %v1705 = vunpack.c.h.b16 %v1313
    %v1706 = vunpack.c.l.b16 %v1314
    %v1707 = vunpack.c.h.b16 %v1314
    %v1708 = vunpack.c.l.b16 %v1315
    %v1709 = vunpack.c.h.b16 %v1315
    %v1710 = vpack.c.b16 %v1458, %v1454
    %v1711 = vpack.c.b16 %v1459, %v1455
    %v1712 = vpack.c.b16 %v1460, %v1456
    %v1713 = vpack.c.b16 %v1461, %v1457
    %v1714 = vpack.c.b16 %v1466, %v1462
    %v1715 = vpack.c.b16 %v1467, %v1463
    %v1716 = vpack.c.b16 %v1468, %v1464
    %v1717 = vpack.c.b16 %v1469, %v1465
    %v1718 = vpack.c.b16 %v1474, %v1470
    %v1719 = vpack.c.b16 %v1475, %v1471
    %v1720 = vpack.c.b16 %v1476, %v1472
    %v1721 = vpack.c.b16 %v1477, %v1473
    %v1722 = vpack.c.b16 %v1482, %v1478
    %v1723 = vpack.c.b16 %v1483, %v1479
    %v1724 = vpack.c.b16 %v1484, %v1480
    %v1725 = vpack.c.b16 %v1485, %v1481
    %v1726 = vpack.c.b16 %v1490, %v1486
    %v1727 = vpack.c.b16 %v1491, %v1487
    %v1728 = vpack.c.b16 %v1492, %v1488
    %v1729 = vpack.c.b16 %v1493, %v1489
    %v1730 = vpack.c.b16 %v1498, %v1494
    %v1731 = vpack.c.b16 %v1499, %v1495
    %v1732 = vpack.c.b16 %v1500, %v1496
    %v1733 = vpack.c.b16 %v1501, %v1497
    %v1734 = vpack.c.b16 %v1506, %v1502
    %v1735 = vpack.c.b16 %v1507, %v1503
    %v1736 = vpack.c.b16 %v1508, %v1504
    %v1737 = vpack.c.b16 %v1509, %v1505
    %v1738 = vpack.c.b16 %v1514, %v1510
    %v1739 = vpack.c.b16 %v1515, %v1511
    %v1740 = vpack.c.b16 %v1516, %v1512
    %v1741 = vpack.c.b16 %v1517, %v1513
    %v1742 = vpack.c.b16 %v1522, %v1518
    %v1743 = vpack.c.b16 %v1523, %v1519
    %v1744 = vpack.c.b16 %v1524, %v1520
    %v1745 = vpack.c.b16 %v1525, %v1521
    %v1746 = vpack.c.b16 %v1530, %v1526
    %v1747 = vpack.c.b16 %v1531, %v1527
    %v1748 = vpack.c.b16 %v1532, %v1528
    %v1749 = vpack.c.b16 %v1533, %v1529
    %v1750 = vpack.c.b16 %v1538, %v1534
    %v1751 = vpack.c.b16 %v1539, %v1535
    %v1752 = vpack.c.b16 %v1540, %v1536
    %v1753 = vpack.c.b16 %v1541, %v1537
    %v1754 = vpack.c.b16 %v1546, %v1542
    %v1755 = vpack.c.b16 %v1547, %v1543
    %v1756 = vpack.c.b16 %v1548, %v1544
    %v1757 = vpack.c.b16 %v1549, %v1545
    %v1758 = vpack.c.b16 %v1554, %v1550
    %v1759 = vpack.c.b16 %v1555, %v1551
    %v1760 = vpack.c.b16 %v1556, %v1552
    %v1761 = vpack.c.b16 %v1557, %v1553
    %v1762 = vpack.c.b16 %v1562, %v1558
    %v1763 = vpack.c.b16 %v1563, %v1559
    %v1764 = vpack.c.b16 %v1564, %v1560
    %v1765 = vpack.c.b16 %v1565, %v1561
    %v1766 = vpack.c.b16 %v1570, %v1566
    %v1767 = vpack.c.b16 %v1571, %v1567
    %v1768 = vpack.c.b16 %v1572, %v1568
    %v1769 = vpack.c.b16 %v1573, %v1569
    %v1770 = vpack.c.b16 %v1578, %v1574
    %v1771 = vpack.c.b16 %v1579, %v1575
    %v1772 = vpack.c.b16 %v1580, %v1576
    %v1773 = vpack.c.b16 %v1581, %v1577
    %v1774 = vpack.c.b16 %v1586, %v1582
    %v1775 = vpack.c.b16 %v1587, %v1583
    %v1776 = vpack.c.b16 %v1588, %v1584
    %v1777 = vpack.c.b16 %v1589, %v1585
    %v1778 = vpack.c.b16 %v1594, %v1590
    %v1779 = vpack.c.b16 %v1595, %v1591
    %v1780 = vpack.c.b16 %v1596, %v1592
    %v1781 = vpack.c.b16 %v1597, %v1593
    %v1782 = vpack.c.b16 %v1602, %v1598
    %v1783 = vpack.c.b16 %v1603, %v1599
    %v1784 = vpack.c.b16 %v1604, %v1600
    %v1785 = vpack.c.b16 %v1605, %v1601
    %v1786 = vpack.c.b16 %v1610, %v1606
    %v1787 = vpack.c.b16 %v1611, %v1607
    %v1788 = vpack.c.b16 %v1612, %v1608
    %v1789 = vpack.c.b16 %v1613, %v1609
    %v1790 = vpack.c.b16 %v1618, %v1614
    %v1791 = vpack.c.b16 %v1619, %v1615
    %v1792 = vpack.c.b16 %v1620, %v1616
    %v1793 = vpack.c.b16 %v1621, %v1617
    %v1794 = vpack.c.b16 %v1626, %v1622
    %v1795 = vpack.c.b16 %v1627, %v1623
    %v1796 = vpack.c.b16 %v1628, %v1624
    %v1797 = vpack.c.b16 %v1629, %v1625
    %v1798 = vpack.c.b16 %v1634, %v1630
    %v1799 = vpack.c.b16 %v1635, %v1631
    %v1800 = vpack.c.b16 %v1636, %v1632
    %v1801 = vpack.c.b16 %v1637, %v1633
    %v1802 = vpack.c.b16 %v1642, %v1638
    %v1803 = vpack.c.b16 %v1643, %v1639
    %v1804 = vpack.c.b16 %v1644, %v1640
    %v1805 = vpack.c.b16 %v1645, %v1641
    %v1806 = vpack.c.b16 %v1650, %v1646
    %v1807 = vpack.c.b16 %v1651, %v1647
    %v1808 = vpack.c.b16 %v1652, %v1648
    %v1809 = vpack.c.b16 %v1653, %v1649
    %v1810 = vpack.c.b16 %v1658, %v1654
    %v1811 = vpack.c.b16 %v1659, %v1655
    %v1812 = vpack.c.b16 %v1660, %v1656
    %v1813 = vpack.c.b16 %v1661, %v1657
    %v1814 = vpack.c.b16 %v1666, %v1662
    %v1815 = vpack.c.b16 %v1667, %v1663
    %v1816 = vpack.c.b16 %v1668, %v1664
    %v1817 = vpack.c.b16 %v1669, %v1665
    %v1818 = vpack.c.b16 %v1674, %v1670
    %v1819 = vpack.c.b16 %v1675, %v1671
    %v1820 = vpack.c.b16 %v1676, %v1672
    %v1821 = vpack.c.b16 %v1677, %v1673
    %v1822 = vpack.c.b16 %v1682, %v1678
    %v1823 = vpack.c.b16 %v1683, %v1679
    %v1824 = vpack.c.b16 %v1684, %v1680
    %v1825 = vpack.c.b16 %v1685, %v1681
    %v1826 = vpack.c.b16 %v1690, %v1686
    %v1827 = vpack.c.b16 %v1691, %v1687
    %v1828 = vpack.c.b16 %v1692, %v1688
    %v1829 = vpack.c.b16 %v1693, %v1689
    %v1830 = vpack.c.b16 %v1698, %v1694
    %v1831 = vpack.c.b16 %v1699, %v1695
    %v1832 = vpack.c.b16 %v1700, %v1696
    %v1833 = vpack.c.b16 %v1701, %v1697
    %v1834 = vpack.c.b16 %v1706, %v1702
    %v1835 = vpack.c.b16 %v1707, %v1703
    %v1836 = vpack.c.b16 %v1708, %v1704
    %v1837 = vpack.c.b16 %v1709, %v1705
    %1966 = vmatpush.bf16.msra.mxu0 %v1738
    %1967 = vmatpush.bf16.msra.mxu0 %v1734
    %1968 = vmatpush.bf16.msra.mxu0 %v1730
    %1969 = vmatpush.bf16.msra.mxu0 %v1726
    %1970 = vmatpush.bf16.msra.mxu0 %v1722
    %1971 = vmatpush.bf16.msra.mxu0 %v1718
    %1972 = vmatpush.bf16.msra.mxu0 %v1714
    %1973 = vmatpush.bf16.msra.mxu0 %v1710
    %1974 = vmatmul.bf16.gmra.mxu0 %v1184
    %v1975 = vpop.f32.mrf.mxu0
    %v1976 = vadd.f32 %v1318, %v1975
    %v1977 = vpop.f32.mrf.mxu0
    %v1978 = vadd.f32 %v1318, %v1977
    %1979 = vdwg.mxu0
    %1980 = vmatpush.bf16.msra.mxu0 %v1770
    %1981 = vmatpush.bf16.msra.mxu0 %v1766
    %1982 = vmatpush.bf16.msra.mxu0 %v1762
    %1983 = vmatpush.bf16.msra.mxu0 %v1758
    %1984 = vmatpush.bf16.msra.mxu0 %v1754
    %1985 = vmatpush.bf16.msra.mxu0 %v1750
    %1986 = vmatpush.bf16.msra.mxu0 %v1746
    %1987 = vmatpush.bf16.msra.mxu0 %v1742
    %1988 = vmatmul.bf16.gmra.mxu0 %v1185
    %v1989 = vpop.f32.mrf.mxu0
    %v1990 = vadd.f32 %v1976, %v1989
    %v1991 = vpop.f32.mrf.mxu0
    %v1992 = vadd.f32 %v1978, %v1991
    %1993 = vdwg.mxu0
    %1994 = vmatpush.bf16.msra.mxu0 %v1802
    %1995 = vmatpush.bf16.msra.mxu0 %v1798
    %1996 = vmatpush.bf16.msra.mxu0 %v1794
    %1997 = vmatpush.bf16.msra.mxu0 %v1790
    %1998 = vmatpush.bf16.msra.mxu0 %v1786
    %1999 = vmatpush.bf16.msra.mxu0 %v1782
    %2000 = vmatpush.bf16.msra.mxu0 %v1778
    %2001 = vmatpush.bf16.msra.mxu0 %v1774
    %2002 = vmatmul.bf16.gmra.mxu0 %v1186
    %v2003 = vpop.f32.mrf.mxu0
    %v2004 = vadd.f32 %v1990, %v2003
    %v2005 = vpop.f32.mrf.mxu0
    %v2006 = vadd.f32 %v1992, %v2005
    %2007 = vdwg.mxu0
    %2008 = vmatpush.bf16.msra.mxu0 %v1834
    %2009 = vmatpush.bf16.msra.mxu0 %v1830
    %2010 = vmatpush.bf16.msra.mxu0 %v1826
    %2011 = vmatpush.bf16.msra.mxu0 %v1822
    %2012 = vmatpush.bf16.msra.mxu0 %v1818
    %2013 = vmatpush.bf16.msra.mxu0 %v1814
    %2014 = vmatpush.bf16.msra.mxu0 %v1810
    %2015 = vmatpush.bf16.msra.mxu0 %v1806
    %2016 = vmatmul.bf16.gmra.mxu0 %v1187
    %v2017 = vpop.f32.mrf.mxu0
    %v2018 = vadd.f32 %v2004, %v2017
    %v2019 = vpop.f32.mrf.mxu0
    %v2020 = vadd.f32 %v2006, %v2019
    %2021 = vdwg.mxu0
    %2022 = vmatpush.bf16.msra.mxu0 %v1739
    %2023 = vmatpush.bf16.msra.mxu0 %v1735
    %2024 = vmatpush.bf16.msra.mxu0 %v1731
    %2025 = vmatpush.bf16.msra.mxu0 %v1727
    %2026 = vmatpush.bf16.msra.mxu0 %v1723
    %2027 = vmatpush.bf16.msra.mxu0 %v1719
    %2028 = vmatpush.bf16.msra.mxu0 %v1715
    %2029 = vmatpush.bf16.msra.mxu0 %v1711
    %2030 = vmatmul.bf16.gmra.mxu0 %v1184
    %v2031 = vpop.f32.mrf.mxu0
    %v2032 = vadd.f32 %v1319, %v2031
    %v2033 = vpop.f32.mrf.mxu0
    %v2034 = vadd.f32 %v1319, %v2033
    %2035 = vdwg.mxu0
    %2036 = vmatpush.bf16.msra.mxu0 %v1771
    %2037 = vmatpush.bf16.msra.mxu0 %v1767
    %2038 = vmatpush.bf16.msra.mxu0 %v1763
    %2039 = vmatpush.bf16.msra.mxu0 %v1759
    %2040 = vmatpush.bf16.msra.mxu0 %v1755
    %2041 = vmatpush.bf16.msra.mxu0 %v1751
    %2042 = vmatpush.bf16.msra.mxu0 %v1747
    %2043 = vmatpush.bf16.msra.mxu0 %v1743
    %2044 = vmatmul.bf16.gmra.mxu0 %v1185
    %v2045 = vpop.f32.mrf.mxu0
    %v2046 = vadd.f32 %v2032, %v2045
    %v2047 = vpop.f32.mrf.mxu0
    %v2048 = vadd.f32 %v2034, %v2047
    %2049 = vdwg.mxu0
    %2050 = vmatpush.bf16.msra.mxu0 %v1803
    %2051 = vmatpush.bf16.msra.mxu0 %v1799
    %2052 = vmatpush.bf16.msra.mxu0 %v1795
    %2053 = vmatpush.bf16.msra.mxu0 %v1791
    %2054 = vmatpush.bf16.msra.mxu0 %v1787
    %2055 = vmatpush.bf16.msra.mxu0 %v1783
    %2056 = vmatpush.bf16.msra.mxu0 %v1779
    %2057 = vmatpush.bf16.msra.mxu0 %v1775
    %2058 = vmatmul.bf16.gmra.mxu0 %v1186
    %v2059 = vpop.f32.mrf.mxu0
    %v2060 = vadd.f32 %v2046, %v2059
    %v2061 = vpop.f32.mrf.mxu0
    %v2062 = vadd.f32 %v2048, %v2061
    %2063 = vdwg.mxu0
    %2064 = vmatpush.bf16.msra.mxu0 %v1835
    %2065 = vmatpush.bf16.msra.mxu0 %v1831
    %2066 = vmatpush.bf16.msra.mxu0 %v1827
    %2067 = vmatpush.bf16.msra.mxu0 %v1823
    %2068 = vmatpush.bf16.msra.mxu0 %v1819
    %2069 = vmatpush.bf16.msra.mxu0 %v1815
    %2070 = vmatpush.bf16.msra.mxu0 %v1811
    %2071 = vmatpush.bf16.msra.mxu0 %v1807
    %2072 = vmatmul.bf16.gmra.mxu0 %v1187
    %v2073 = vpop.f32.mrf.mxu0
    %v2074 = vadd.f32 %v2060, %v2073
    %v2075 = vpop.f32.mrf.mxu0
    %v2076 = vadd.f32 %v2062, %v2075
    %2077 = vdwg.mxu0
    %2078 = vmatpush.bf16.msra.mxu0 %v1740
    %2079 = vmatpush.bf16.msra.mxu0 %v1736
    %2080 = vmatpush.bf16.msra.mxu0 %v1732
    %2081 = vmatpush.bf16.msra.mxu0 %v1728
    %2082 = vmatpush.bf16.msra.mxu0 %v1724
    %2083 = vmatpush.bf16.msra.mxu0 %v1720
    %2084 = vmatpush.bf16.msra.mxu0 %v1716
    %2085 = vmatpush.bf16.msra.mxu0 %v1712
    %2086 = vmatmul.bf16.gmra.mxu0 %v1184
    %v2087 = vpop.f32.mrf.mxu0
    %v2088 = vadd.f32 %v1320, %v2087
    %v2089 = vpop.f32.mrf.mxu0
    %v2090 = vadd.f32 %v1320, %v2089
    %2091 = vdwg.mxu0
    %2092 = vmatpush.bf16.msra.mxu0 %v1772
    %2093 = vmatpush.bf16.msra.mxu0 %v1768
    %2094 = vmatpush.bf16.msra.mxu0 %v1764
    %2095 = vmatpush.bf16.msra.mxu0 %v1760
    %2096 = vmatpush.bf16.msra.mxu0 %v1756
    %2097 = vmatpush.bf16.msra.mxu0 %v1752
    %2098 = vmatpush.bf16.msra.mxu0 %v1748
    %2099 = vmatpush.bf16.msra.mxu0 %v1744
    %2100 = vmatmul.bf16.gmra.mxu0 %v1185
    %v2101 = vpop.f32.mrf.mxu0
    %v2102 = vadd.f32 %v2088, %v2101
    %v2103 = vpop.f32.mrf.mxu0
    %v2104 = vadd.f32 %v2090, %v2103
    %2105 = vdwg.mxu0
    %2106 = vmatpush.bf16.msra.mxu0 %v1804
    %2107 = vmatpush.bf16.msra.mxu0 %v1800
    %2108 = vmatpush.bf16.msra.mxu0 %v1796
    %2109 = vmatpush.bf16.msra.mxu0 %v1792
    %2110 = vmatpush.bf16.msra.mxu0 %v1788
    %2111 = vmatpush.bf16.msra.mxu0 %v1784
    %2112 = vmatpush.bf16.msra.mxu0 %v1780
    %2113 = vmatpush.bf16.msra.mxu0 %v1776
    %2114 = vmatmul.bf16.gmra.mxu0 %v1186
    %v2115 = vpop.f32.mrf.mxu0
    %v2116 = vadd.f32 %v2102, %v2115
    %v2117 = vpop.f32.mrf.mxu0
    %v2118 = vadd.f32 %v2104, %v2117
    %2119 = vdwg.mxu0
    %2120 = vmatpush.bf16.msra.mxu0 %v1836
    %2121 = vmatpush.bf16.msra.mxu0 %v1832
    %2122 = vmatpush.bf16.msra.mxu0 %v1828
    %2123 = vmatpush.bf16.msra.mxu0 %v1824
    %2124 = vmatpush.bf16.msra.mxu0 %v1820
    %2125 = vmatpush.bf16.msra.mxu0 %v1816
    %2126 = vmatpush.bf16.msra.mxu0 %v1812
    %2127 = vmatpush.bf16.msra.mxu0 %v1808
    %2128 = vmatmul.bf16.gmra.mxu0 %v1187
    %v2129 = vpop.f32.mrf.mxu0
    %v2130 = vadd.f32 %v2116, %v2129
    %v2131 = vpop.f32.mrf.mxu0
    %v2132 = vadd.f32 %v2118, %v2131
    %2133 = vdwg.mxu0
    %2134 = vmatpush.bf16.msra.mxu0 %v1741
    %2135 = vmatpush.bf16.msra.mxu0 %v1737
    %2136 = vmatpush.bf16.msra.mxu0 %v1733
    %2137 = vmatpush.bf16.msra.mxu0 %v1729
    %2138 = vmatpush.bf16.msra.mxu0 %v1725
    %2139 = vmatpush.bf16.msra.mxu0 %v1721
    %2140 = vmatpush.bf16.msra.mxu0 %v1717
    %2141 = vmatpush.bf16.msra.mxu0 %v1713
    %2142 = vmatmul.bf16.gmra.mxu0 %v1184
    %v2143 = vpop.f32.mrf.mxu0
    %v2144 = vadd.f32 %v1321, %v2143
    %v2145 = vpop.f32.mrf.mxu0
    %v2146 = vadd.f32 %v1321, %v2145
    %2147 = vdwg.mxu0
    %2148 = vmatpush.bf16.msra.mxu0 %v1773
    %2149 = vmatpush.bf16.msra.mxu0 %v1769
    %2150 = vmatpush.bf16.msra.mxu0 %v1765
    %2151 = vmatpush.bf16.msra.mxu0 %v1761
    %2152 = vmatpush.bf16.msra.mxu0 %v1757
    %2153 = vmatpush.bf16.msra.mxu0 %v1753
    %2154 = vmatpush.bf16.msra.mxu0 %v1749
    %2155 = vmatpush.bf16.msra.mxu0 %v1745
    %2156 = vmatmul.bf16.gmra.mxu0 %v1185
    %v2157 = vpop.f32.mrf.mxu0
    %v2158 = vadd.f32 %v2144, %v2157
    %v2159 = vpop.f32.mrf.mxu0
    %v2160 = vadd.f32 %v2146, %v2159
    %2161 = vdwg.mxu0
    %2162 = vmatpush.bf16.msra.mxu0 %v1805
    %2163 = vmatpush.bf16.msra.mxu0 %v1801
    %2164 = vmatpush.bf16.msra.mxu0 %v1797
    %2165 = vmatpush.bf16.msra.mxu0 %v1793
    %2166 = vmatpush.bf16.msra.mxu0 %v1789
    %2167 = vmatpush.bf16.msra.mxu0 %v1785
    %2168 = vmatpush.bf16.msra.mxu0 %v1781
    %2169 = vmatpush.bf16.msra.mxu0 %v1777
    %2170 = vmatmul.bf16.gmra.mxu0 %v1186
    %v2171 = vpop.f32.mrf.mxu0
    %v2172 = vadd.f32 %v2158, %v2171
    %v2173 = vpop.f32.mrf.mxu0
    %v2174 = vadd.f32 %v2160, %v2173
    %2175 = vdwg.mxu0
    %2176 = vmatpush.bf16.msra.mxu0 %v1837
    %2177 = vmatpush.bf16.msra.mxu0 %v1833
    %2178 = vmatpush.bf16.msra.mxu0 %v1829
    %2179 = vmatpush.bf16.msra.mxu0 %v1825
    %2180 = vmatpush.bf16.msra.mxu0 %v1821
    %2181 = vmatpush.bf16.msra.mxu0 %v1817
    %2182 = vmatpush.bf16.msra.mxu0 %v1813
    %2183 = vmatpush.bf16.msra.mxu0 %v1809
    %2184 = vmatmul.bf16.gmra.mxu0 %v1187
    %v2185 = vpop.f32.mrf.mxu0
    %v2186 = vadd.f32 %v2172, %v2185
    %v2187 = vpop.f32.mrf.mxu0
    %v2188 = vadd.f32 %v2174, %v2187
    %2189 = vdwg.mxu0
    %v2190 = vmax.f32 %v2018, 0.0
    %v2191 = vmax.f32 %v2074, 0.0
    %v2192 = vmax.f32 %v2130, 0.0
    %v2193 = vmax.f32 %v2186, 0.0
    %v2194 = vmax.f32 %v2020, 0.0
    %v2195 = vmax.f32 %v2076, 0.0
    %v2196 = vmax.f32 %v2132, 0.0
    %v2197 = vmax.f32 %v2188, 0.0
    %v2198 = vpack.c.bf16 %v2194, %v2190
    %v2199 = vpack.c.bf16 %v2195, %v2191
    %v2200 = vpack.c.bf16 %v2196, %v2192
    %v2201 = vpack.c.bf16 %v2197, %v2193
    %v2202 = vld [vmem:[%s7] sm:$0xf]
    %v2203 = vld [vmem:[%s7 + $0x4] sm:$0xf]
    %v2204 = vld [vmem:[%s7 + $0x8] sm:$0xf]
    %v2205 = vld [vmem:[%s7 + $0xc] sm:$0xf]
    %v2206 = vld [vmem:[%s7 + $0x10] sm:$0xf]
    %v2207 = vld [vmem:[%s7 + $0x14] sm:$0xf]
    %v2208 = vld [vmem:[%s7 + $0x18] sm:$0xf]
    %v2209 = vld [vmem:[%s7 + $0x1c] sm:$0xf]
    %v2210 = vld [vmem:[%s7 + $0x20] sm:$0xf]
    %v2211 = vld [vmem:[%s7 + $0x24] sm:$0xf]
    %v2212 = vld [vmem:[%s7 + $0x28] sm:$0xf]
    %v2213 = vld [vmem:[%s7 + $0x2c] sm:$0xf]
    %v2214 = vld [vmem:[%s7 + $0x30] sm:$0xf]
    %v2215 = vld [vmem:[%s7 + $0x34] sm:$0xf]
    %v2216 = vld [vmem:[%s7 + $0x38] sm:$0xf]
    %v2217 = vld [vmem:[%s7 + $0x3c] sm:$0xf]
    %v2218 = vld [vmem:[%s7 + $0x40] sm:$0xf]
    %v2219 = vld [vmem:[%s7 + $0x44] sm:$0xf]
    %v2220 = vld [vmem:[%s7 + $0x48] sm:$0xf]
    %v2221 = vld [vmem:[%s7 + $0x4c] sm:$0xf]
    %v2222 = vld [vmem:[%s7 + $0x50] sm:$0xf]
    %v2223 = vld [vmem:[%s7 + $0x54] sm:$0xf]
    %v2224 = vld [vmem:[%s7 + $0x58] sm:$0xf]
    %v2225 = vld [vmem:[%s7 + $0x5c] sm:$0xf]
    %v2226 = vld [vmem:[%s7 + $0x60] sm:$0xf]
    %v2227 = vld [vmem:[%s7 + $0x64] sm:$0xf]
    %v2228 = vld [vmem:[%s7 + $0x68] sm:$0xf]
    %v2229 = vld [vmem:[%s7 + $0x6c] sm:$0xf]
    %v2230 = vld [vmem:[%s7 + $0x70] sm:$0xf]
    %v2231 = vld [vmem:[%s7 + $0x74] sm:$0xf]
    %v2232 = vld [vmem:[%s7 + $0x78] sm:$0xf]
    %v2233 = vld [vmem:[%s7 + $0x7c] sm:$0xf]
    %v2234 = vld [vmem:[%s7 + $0x80] sm:$0xf]
    %v2235 = vld [vmem:[%s7 + $0x84] sm:$0xf]
    %v2236 = vld [vmem:[%s7 + $0x88] sm:$0xf]
    %v2237 = vld [vmem:[%s7 + $0x8c] sm:$0xf]
    %v2238 = vld [vmem:[%s7 + $0x90] sm:$0xf]
    %v2239 = vld [vmem:[%s7 + $0x94] sm:$0xf]
    %v2240 = vld [vmem:[%s7 + $0x98] sm:$0xf]
    %v2241 = vld [vmem:[%s7 + $0x9c] sm:$0xf]
    %v2242 = vld [vmem:[%s7 + $0xa0] sm:$0xf]
    %v2243 = vld [vmem:[%s7 + $0xa4] sm:$0xf]
    %v2244 = vld [vmem:[%s7 + $0xa8] sm:$0xf]
    %v2245 = vld [vmem:[%s7 + $0xac] sm:$0xf]
    %v2246 = vld [vmem:[%s7 + $0xb0] sm:$0xf]
    %v2247 = vld [vmem:[%s7 + $0xb4] sm:$0xf]
    %v2248 = vld [vmem:[%s7 + $0xb8] sm:$0xf]
    %v2249 = vld [vmem:[%s7 + $0xbc] sm:$0xf]
    %v2250 = vld [vmem:[%s7 + $0xc0] sm:$0xf]
    %v2251 = vld [vmem:[%s7 + $0xc4] sm:$0xf]
    %v2252 = vld [vmem:[%s7 + $0xc8] sm:$0xf]
    %v2253 = vld [vmem:[%s7 + $0xcc] sm:$0xf]
    %v2254 = vld [vmem:[%s7 + $0xd0] sm:$0xf]
    %v2255 = vld [vmem:[%s7 + $0xd4] sm:$0xf]
    %v2256 = vld [vmem:[%s7 + $0xd8] sm:$0xf]
    %v2257 = vld [vmem:[%s7 + $0xdc] sm:$0xf]
    %v2258 = vld [vmem:[%s7 + $0xe0] sm:$0xf]
    %v2259 = vld [vmem:[%s7 + $0xe4] sm:$0xf]
    %v2260 = vld [vmem:[%s7 + $0xe8] sm:$0xf]
    %v2261 = vld [vmem:[%s7 + $0xec] sm:$0xf]
    %v2262 = vld [vmem:[%s7 + $0xf0] sm:$0xf]
    %v2263 = vld [vmem:[%s7 + $0xf4] sm:$0xf]
    %v2264 = vld [vmem:[%s7 + $0xf8] sm:$0xf]
    %v2265 = vld [vmem:[%s7 + $0xfc] sm:$0xf]
    %v2266 = vld [vmem:[%s8] sm:$0x1]
    %v2268 = vperm.slane %v2266, 0
    %v2334 = vunpack.c.l.b16 %v2202
    %v2335 = vunpack.c.l.b16 %v2203
    %v2336 = vunpack.c.l.b16 %v2204
    %v2337 = vunpack.c.l.b16 %v2205
    %v2338 = vunpack.c.l.b16 %v2206
    %v2339 = vunpack.c.l.b16 %v2207
    %v2340 = vunpack.c.l.b16 %v2208
    %v2341 = vunpack.c.l.b16 %v2209
    %v2342 = vunpack.c.l.b16 %v2210
    %v2343 = vunpack.c.l.b16 %v2211
    %v2344 = vunpack.c.l.b16 %v2212
    %v2345 = vunpack.c.l.b16 %v2213
    %v2346 = vunpack.c.l.b16 %v2214
    %v2347 = vunpack.c.l.b16 %v2215
    %v2348 = vunpack.c.l.b16 %v2216
    %v2349 = vunpack.c.l.b16 %v2217
    %v2350 = vunpack.c.l.b16 %v2218
    %v2351 = vunpack.c.l.b16 %v2219
    %v2352 = vunpack.c.l.b16 %v2220
    %v2353 = vunpack.c.l.b16 %v2221
    %v2354 = vunpack.c.l.b16 %v2222
    %v2355 = vunpack.c.l.b16 %v2223
    %v2356 = vunpack.c.l.b16 %v2224
    %v2357 = vunpack.c.l.b16 %v2225
    %v2358 = vunpack.c.l.b16 %v2226
    %v2359 = vunpack.c.l.b16 %v2227
    %v2360 = vunpack.c.l.b16 %v2228
    %v2361 = vunpack.c.l.b16 %v2229
    %v2362 = vunpack.c.l.b16 %v2230
    %v2363 = vunpack.c.l.b16 %v2231
    %v2364 = vunpack.c.l.b16 %v2232
    %v2365 = vunpack.c.l.b16 %v2233
    %v2366 = vunpack.c.l.b16 %v2234
    %v2367 = vunpack.c.l.b16 %v2235
    %v2368 = vunpack.c.l.b16 %v2236
    %v2369 = vunpack.c.l.b16 %v2237
    %v2370 = vunpack.c.l.b16 %v2238
    %v2371 = vunpack.c.l.b16 %v2239
    %v2372 = vunpack.c.l.b16 %v2240
    %v2373 = vunpack.c.l.b16 %v2241
    %v2374 = vunpack.c.l.b16 %v2242
    %v2375 = vunpack.c.l.b16 %v2243
    %v2376 = vunpack.c.l.b16 %v2244
    %v2377 = vunpack.c.l.b16 %v2245
    %v2378 = vunpack.c.l.b16 %v2246
    %v2379 = vunpack.c.l.b16 %v2247
    %v2380 = vunpack.c.l.b16 %v2248
    %v2381 = vunpack.c.l.b16 %v2249
    %v2382 = vunpack.c.l.b16 %v2250
    %v2383 = vunpack.c.l.b16 %v2251
    %v2384 = vunpack.c.l.b16 %v2252
    %v2385 = vunpack.c.l.b16 %v2253
    %v2386 = vunpack.c.l.b16 %v2254
    %v2387 = vunpack.c.l.b16 %v2255
    %v2388 = vunpack.c.l.b16 %v2256
    %v2389 = vunpack.c.l.b16 %v2257
    %v2390 = vunpack.c.l.b16 %v2258
    %v2391 = vunpack.c.l.b16 %v2259
    %v2392 = vunpack.c.l.b16 %v2260
    %v2393 = vunpack.c.l.b16 %v2261
    %v2394 = vunpack.c.l.b16 %v2262
    %v2395 = vunpack.c.l.b16 %v2263
    %v2396 = vunpack.c.l.b16 %v2264
    %v2397 = vunpack.c.l.b16 %v2265
    %v2398 = vpack.c.b16 %v2335, %v2334
    %v2399 = vpack.c.b16 %v2337, %v2336
    %v2400 = vpack.c.b16 %v2339, %v2338
    %v2401 = vpack.c.b16 %v2341, %v2340
    %v2402 = vpack.c.b16 %v2343, %v2342
    %v2403 = vpack.c.b16 %v2345, %v2344
    %v2404 = vpack.c.b16 %v2347, %v2346
    %v2405 = vpack.c.b16 %v2349, %v2348
    %v2406 = vpack.c.b16 %v2351, %v2350
    %v2407 = vpack.c.b16 %v2353, %v2352
    %v2408 = vpack.c.b16 %v2355, %v2354
    %v2409 = vpack.c.b16 %v2357, %v2356
    %v2410 = vpack.c.b16 %v2359, %v2358
    %v2411 = vpack.c.b16 %v2361, %v2360
    %v2412 = vpack.c.b16 %v2363, %v2362
    %v2413 = vpack.c.b16 %v2365, %v2364
    %v2414 = vpack.c.b16 %v2367, %v2366
    %v2415 = vpack.c.b16 %v2369, %v2368
    %v2416 = vpack.c.b16 %v2371, %v2370
    %v2417 = vpack.c.b16 %v2373, %v2372
    %v2418 = vpack.c.b16 %v2375, %v2374
    %v2419 = vpack.c.b16 %v2377, %v2376
    %v2420 = vpack.c.b16 %v2379, %v2378
    %v2421 = vpack.c.b16 %v2381, %v2380
    %v2422 = vpack.c.b16 %v2383, %v2382
    %v2423 = vpack.c.b16 %v2385, %v2384
    %v2424 = vpack.c.b16 %v2387, %v2386
    %v2425 = vpack.c.b16 %v2389, %v2388
    %v2426 = vpack.c.b16 %v2391, %v2390
    %v2427 = vpack.c.b16 %v2393, %v2392
    %v2428 = vpack.c.b16 %v2395, %v2394
    %v2429 = vpack.c.b16 %v2397, %v2396
    %2462 = vmatpush.bf16.msra.mxu0 %v2405
    %2463 = vmatpush.bf16.msra.mxu0 %v2404
    %2464 = vmatpush.bf16.msra.mxu0 %v2403
    %2465 = vmatpush.bf16.msra.mxu0 %v2402
    %2466 = vmatpush.bf16.msra.mxu0 %v2401
    %2467 = vmatpush.bf16.msra.mxu0 %v2400
    %2468 = vmatpush.bf16.msra.mxu0 %v2399
    %2469 = vmatpush.bf16.msra.mxu0 %v2398
    %2470 = vmatmul.bf16.gmra.mxu0 %v2198
    %v2471 = vpop.f32.mrf.mxu0
    %v2472 = vadd.f32 %v2268, %v2471
    %v2473 = vpop.f32.mrf.mxu0
    %v2474 = vadd.f32 %v2268, %v2473
    %2475 = vdwg.mxu0
    %2476 = vmatpush.bf16.msra.mxu0 %v2413
    %2477 = vmatpush.bf16.msra.mxu0 %v2412
    %2478 = vmatpush.bf16.msra.mxu0 %v2411
    %2479 = vmatpush.bf16.msra.mxu0 %v2410
    %2480 = vmatpush.bf16.msra.mxu0 %v2409
    %2481 = vmatpush.bf16.msra.mxu0 %v2408
    %2482 = vmatpush.bf16.msra.mxu0 %v2407
    %2483 = vmatpush.bf16.msra.mxu0 %v2406
    %2484 = vmatmul.bf16.gmra.mxu0 %v2199
    %v2485 = vpop.f32.mrf.mxu0
    %v2486 = vadd.f32 %v2472, %v2485
    %v2487 = vpop.f32.mrf.mxu0
    %v2488 = vadd.f32 %v2474, %v2487
    %2489 = vdwg.mxu0
    %2490 = vmatpush.bf16.msra.mxu0 %v2421
    %2491 = vmatpush.bf16.msra.mxu0 %v2420
    %2492 = vmatpush.bf16.msra.mxu0 %v2419
    %2493 = vmatpush.bf16.msra.mxu0 %v2418
    %2494 = vmatpush.bf16.msra.mxu0 %v2417
    %2495 = vmatpush.bf16.msra.mxu0 %v2416
    %2496 = vmatpush.bf16.msra.mxu0 %v2415
    %2497 = vmatpush.bf16.msra.mxu0 %v2414
    %2498 = vmatmul.bf16.gmra.mxu0 %v2200
    %v2499 = vpop.f32.mrf.mxu0
    %v2500 = vadd.f32 %v2486, %v2499
    %v2501 = vpop.f32.mrf.mxu0
    %v2502 = vadd.f32 %v2488, %v2501
    %2503 = vdwg.mxu0
    %2504 = vmatpush.bf16.msra.mxu0 %v2429
    %2505 = vmatpush.bf16.msra.mxu0 %v2428
    %2506 = vmatpush.bf16.msra.mxu0 %v2427
    %2507 = vmatpush.bf16.msra.mxu0 %v2426
    %2508 = vmatpush.bf16.msra.mxu0 %v2425
    %2509 = vmatpush.bf16.msra.mxu0 %v2424
    %2510 = vmatpush.bf16.msra.mxu0 %v2423
    %2511 = vmatpush.bf16.msra.mxu0 %v2422
    %2512 = vmatmul.bf16.gmra.mxu0 %v2201
    %v2513 = vpop.f32.mrf.mxu0
    %v2514 = vadd.f32 %v2500, %v2513
    %v2515 = vpop.f32.mrf.mxu0
    %v2516 = vadd.f32 %v2502, %v2515
    %2517 = vdwg.mxu0
    %v2518 = vlaneseq
    %v2519 = vand.u32 %v2518, 127
    %vm2520 = vcmp.eq.s32.totalorder %v2519, 0
    %v2521 = vxor.u32 %v2514, 2147483648
    %v2522 = vxor.u32 %v2516, 2147483648
    %v2523 = vmul.f32 %v2521, 1.442695
    %v2524 = vpow.pop %v2523
    %v2525 = vmul.f32 %v2522, 1.442695
    %v2526 = vpow.pop %v2525
    %v2527 = vadd.f32 %v2524, 1.0
    %v2528 = vadd.f32 %v2526, 1.0
    %v2529 = vrcp.pop %v2527
    %v2530 = vmul.f32 %v2527, %v2529
    %v2531 = vsub.f32 1.0, %v2530
    %v2532 = vmul.f32 %v2529, %v2531
    %v2533 = vadd.f32 %v2529, %v2532
    %vm2534 = vweird.f32 %v2527
    %vm2535 = vweird.f32 %v2529
    %vm2536 = vmor %vm2534, %vm2535
    %v2537 = vsel %vm2536, %v2529, %v2533
    %v2538 = vand.u32 2147483647, %v2527
    %vm2539 = vcmp.eq.f32.partialorder %v2538, 8.507059e+37
    %v2540 = vand.u32 %v2527, 2147483648
    %v2541 = vor.u32 1.1754944e-38, %v2540
    %v2542 = vsel %vm2539, %v2541, %v2537
    %v2543 = vmul.f32 1.0, %v2542
    %v2544 = vrcp.pop %v2528
    %v2545 = vmul.f32 %v2528, %v2544
    %v2546 = vsub.f32 1.0, %v2545
    %v2547 = vmul.f32 %v2544, %v2546
    %v2548 = vadd.f32 %v2544, %v2547
    %vm2549 = vweird.f32 %v2528
    %vm2550 = vweird.f32 %v2544
    %vm2551 = vmor %vm2549, %vm2550
    %v2552 = vsel %vm2551, %v2544, %v2548
    %v2553 = vand.u32 2147483647, %v2528
    %vm2554 = vcmp.eq.f32.partialorder %v2553, 8.507059e+37
    %v2555 = vand.u32 %v2528, 2147483648
    %v2556 = vor.u32 1.1754944e-38, %v2555
    %v2557 = vsel %vm2554, %v2556, %v2552
    %v2558 = vmul.f32 1.0, %v2557
    %v2559 = vtanh.pop %v2514
    %v2560 = vtanh.pop %v2516
    %v2561 = vsel %vm2520, %v2543, %v2559
    %v2562 = vsel %vm2520, %v2558, %v2560
    %vm2563 = vcmask 15360
    %2564 = vst.msk [vmem:[%s9] sm:$0xff] %vm2563, %v2561
    %2565 = vst.msk [vmem:[%s9 + $0x8] sm:$0xff] %vm2563, %v2562
    // Predicated region
    $region46: #{actor_forward.1} parent=1 // pred_check
      _
    $region47: #{actor_forward.1} parent=1 // pred_check_branch
      %2567 = sbr.rel (0) target = $region49
    $region48: #{actor_forward.1} parent=1 // pred_region
      _
    $region49: #{actor_forward.1} parent=1 // pred_fallthru
      _
    // Predicated region
    $region50: #{actor_forward.1} parent=1 // pred_check
      _
    $region51: #{actor_forward.1} parent=1 // pred_check_branch
      %2569 = sbr.rel (0) target = $region53
    $region52: #{actor_forward.1} parent=1 // pred_region
      _
    $region53: #{actor_forward.1} parent=1 // pred_fallthru
      _
    %2570 = vsyncpa [#allocation3], 1
    %2571 = vsyncpa [#allocation5], 1

</llo_original>
